<compile_context>
chip_gen: v7x
topology: tpu7x:2x2x1
jax: 0.10.0
libtpu: 0.0.40
codegen_flags: <defaults>
</compile_context>

<pallas_src>
import jax
import jax.numpy as jnp
from jax import lax
from jax.experimental import pallas as pl
from jax.experimental.pallas import tpu as pltpu


# ----------------------------------------------------------------------------
# Tiling helpers
# ----------------------------------------------------------------------------
def _largest_divisor_leq(n: int, cap: int) -> int:
    cap = max(1, min(n, cap))
    for d in range(cap, 0, -1):
        if n % d == 0:
            return d
    return 1


def _vmem_capacity_bytes() -> int:
    """Physical per-TensorCore VMEM; conservative fallback if the query fails."""
    try:
        info = pltpu.get_tpu_info()
        return int(getattr(info, "vmem_capacity_bytes", 64 * 1024 * 1024))
    except Exception:
        return 64 * 1024 * 1024      # smallest of v5e/v6e/v7x (v7x: 64 MiB/TC)


def _step_vmem_bytes(th, wo, c1, c2, out_bytes):
    """Rough per-grid-step VMEM footprint (pipelined I/O tiles double-buffered)."""
    x_tile = th * 2 * wo * 2 * c1 * 2            # bf16 main input tile
    halo = 2 * wo * 2 * c1 * 2                   # bf16 halo H-pair
    out_tile = th * wo * 2 * c2 * out_bytes
    weights = 2 * (2 * c1 * c2 + 9 * c2 * c2) + 3 * c2 * 4
    xs = (4 * th + 2) * wo * c1 * 2              # cv2 input copy (bf16)
    y2 = (4 * th + 2) * wo * c2 * (4 + 2)        # cv2 output f32 + bf16 copy
    k_in = th * wo * 3 * c2 * 2                  # fused-K cv3 input (bf16)
    acts = th * wo * c2 * 4 * 3                  # acc, y1, y3 (f32)
    out_tmp = th * wo * 2 * c2 * 4               # concat temp (f32)
    return 2 * (x_tile + halo + out_tile + weights) + xs + y2 + k_in + acts + out_tmp


def _pick_tile_rows(ho, n, cap_rows, budget, wo, c1, c2, out_bytes):
    th = _largest_divisor_leq(ho, cap_rows)
    # shrink until the per-step working set fits the scoped-VMEM budget
    while th > 1 and _step_vmem_bytes(th, wo, c1, c2, out_bytes) > budget:
        th = _largest_divisor_leq(ho, th - 1)
    # v7x megacore: guarantee >= 4 grid points when the batch alone can't feed
    # two TensorCores (harmless ~0.35 us/step overhead on 1-TC chips).
    while th > 1 and n * (ho // th) < 4:
        th = _largest_divisor_leq(ho, th - 1)
    return th


# ----------------------------------------------------------------------------
# Fused kernel: one (batch, output-row-tile) block of the whole TransitionBlock
# ----------------------------------------------------------------------------
def transition_kernel(x_ref, xh_ref, w1_ref, w2_ref, w3_ref, b_ref, o_ref):
    # x_ref : (1, th, 2, Wo, 2*C1) bf16   x H-pairs [i*th, (i+1)*th)
    #          axis 2 = row parity, lane axis packs (col parity, C1)
    # xh_ref: (1, 1, 2, Wo, 2*C1) bf16    H-pair (i*th - 1), clamped at 0; only
    #          its odd row (= x row 2*i*th - 1) is used as the 3x3 top halo.
    # w1/w2 : (C1, C2) bf16, BN scale folded in
    # w3    : (3, 3*C2, C2) bf16, BN scale folded in; per dy the K axis stacks
    #          the dx=0,1,2 taps (matching the [p_left, p_even, p_odd] concat)
    # b_ref : (3, C2) f32  -- rows = folded BN biases of cv1, cv2, cv3
    # o_ref : (1, th, Wo, 2*C2); channels [0:C2]=cv3 branch (x_2), [C2:2C2]=cv1 (x_1)
    i = pl.program_id(1)
    _, th, _, wo, c1x2 = x_ref.shape
    c1 = c1x2 // 2
    c2 = w1_ref.shape[1]
    f32, bf16 = jnp.float32, jnp.bfloat16

    xb = x_ref[...][0]            # (th, 2, Wo, 2*C1)
    xh = xh_ref[...][0, 0, 1]     # (Wo, 2*C1) -- odd row of the halo H-pair
    b = b_ref[...]                # (3, C2) f32
    b1, b2, b3 = b[0:1], b[1:2], b[2:3]

    # ---- branch 1: MaxPool2d(2,2) -> cv1(1x1) -> (+bias) -> SiLU -------------
    rmax = jnp.maximum(xb[:, 0], xb[:, 1])                   # max over row pair
    pooled = jnp.maximum(rmax[..., :c1], rmax[..., c1:])     # max over col pair
    y1 = jnp.dot(pooled.reshape(th * wo, c1), w1_ref[...],
                 preferred_element_type=f32) + b1
    y1 = y1 * jax.nn.sigmoid(y1)                             # (th*Wo, C2) f32

    # ---- branch 2: cv2(1x1)->SiLU, then cv3(3x3, stride 2, pad 1)->SiLU ------
    x_e, x_o = xb[:, 0], xb[:, 1]                            # even / odd x rows
    # all cv2 pixels needed by this tile, as one big-M matmul:
    xs = jnp.concatenate(
        [x_e[..., :c1], x_e[..., c1:],          # even rows: even / odd cols
         x_o[..., :c1], x_o[..., c1:],          # odd  rows: even / odd cols
         xh[None, :, :c1], xh[None, :, c1:]],   # halo row : even / odd cols
        axis=0)                                              # (4*th+2, Wo, C1)
    y2 = jnp.dot(xs.reshape((4 * th + 2) * wo, c1), w2_ref[...],
                 preferred_element_type=f32) + b2
    y2 = y2 * jax.nn.sigmoid(y2)
    y2 = y2.reshape(4 * th + 2, wo, c2)                      # f32

    # halo row of y2 == zero-pad row of cv3 on the first row tile (mask in f32)
    hscale = (i > 0).astype(f32)
    y_h0 = (y2[4 * th:4 * th + 1] * hscale).astype(bf16)
    y_h1 = (y2[4 * th + 1:4 * th + 2] * hscale).astype(bf16)
    y2b = y2[:4 * th].astype(bf16)
    y_e0, y_e1 = y2b[0:th], y2b[th:2 * th]                   # even y2 rows
    y_o0, y_o1 = y2b[2 * th:3 * th], y2b[3 * th:4 * th]      # odd  y2 rows

    # row sets per kernel-tap row dy (y2 row index = 2*out_row + dy - 1)
    if th > 1:
        top_e = jnp.concatenate([y_h0, y_o0[:-1]], axis=0)
        top_o = jnp.concatenate([y_h1, y_o1[:-1]], axis=0)
    else:
        top_e, top_o = y_h0, y_h1
    rows = ((top_e, top_o),      # dy = 0
            (y_e0, y_e1),        # dy = 1
            (y_o0, y_o1))        # dy = 2

    w3t = w3_ref[...]                                        # (3, 3*C2, C2)
    zcol = jnp.zeros((th, 1, c2), bf16)
    acc = None
    for dy, (p_even, p_odd) in enumerate(rows):
        # dx=0 -> odd column j-1 (zero pad at j=0); dx=1 -> even col j; dx=2 -> odd col j
        if wo > 1:
            p_left = jnp.concatenate([zcol, p_odd[:, :-1, :]], axis=1)
        else:
            p_left = zcol
        k_in = jnp.concatenate([p_left, p_even, p_odd], axis=-1)  # (th, Wo, 3*C2)
        part = jnp.dot(k_in.reshape(th * wo, 3 * c2), w3t[dy],
                       preferred_element_type=f32)
        acc = part if acc is None else acc + part
    y3 = acc + b3
    y3 = y3 * jax.nn.sigmoid(y3)                             # (th*Wo, C2) f32

    # torch.cat([x_2, x_1], dim=channel), one lane-dense write at output width
    out = jnp.concatenate([y3.reshape(th, wo, c2).astype(o_ref.dtype),
                           y1.reshape(th, wo, c2).astype(o_ref.dtype)], axis=-1)
    o_ref[...] = out.reshape(1, th, wo, 2 * c2)


# ----------------------------------------------------------------------------
# Wrappers
# ----------------------------------------------------------------------------
def transition_block_nhwc(x_nhwc, p, *, tile_rows=64, out_dtype=jnp.float32):
    """TransitionBlock.forward on NHWC input; returns (N, H/2, W/2, 2*C2)."""
    n, h, w, c1 = x_nhwc.shape
    assert h % 2 == 0 and w % 2 == 0, "TransitionBlock expects even H and W"
    ho, wo = h // 2, w // 2
    c2 = p["w1"].shape[1]
    out_bytes = jnp.dtype(out_dtype).itemsize

    # per-generation VMEM budgeting (v5e/v6e: 128 MiB physical, v7x: 64 MiB)
    vmem_cap = _vmem_capacity_bytes()
    vmem_limit = max(32 * 1024 * 1024, min(int(vmem_cap * 0.75), 100 * 1024 * 1024))
    budget = int(vmem_limit * 0.8)

    # free repack: row parity -> explicit axis, col parity -> folded into lanes
    xr = x_nhwc.astype(jnp.bfloat16).reshape(n, ho, 2, wo, 2 * c1)

    th = _pick_tile_rows(ho, n, tile_rows, budget, wo, c1, c2, out_bytes)
    grid = (n, ho // th)

    flops = 2 * n * ho * wo * c2 * (5 * c1 + 9 * c2)         # cv1 + cv2 + cv3 MACs
    transcendentals = 6 * n * ho * wo * c2                   # sigmoids
    bytes_accessed = (xr.size * 2
                      + n * (ho // th) * 2 * wo * 2 * c1 * 2  # halo re-reads
                      + n * ho * wo * 2 * c2 * out_bytes
                      + (p["w1"].size + p["w2"].size + p["w3"].size) * 2
                      + p["bias"].size * 4)

    return pl.pallas_call(
        transition_kernel,
        out_shape=jax.ShapeDtypeStruct((n, ho, wo, 2 * c2), out_dtype),
        grid=grid,
        in_specs=[
            # main x row tile: H-pairs [i*th, (i+1)*th)
            pl.BlockSpec((1, th, 2, wo, 2 * c1), lambda bn, bi: (bn, bi, 0, 0, 0)),
            # halo: H-pair (i*th - 1), clamped to 0 (masked in-kernel when bi == 0)
            pl.BlockSpec((1, 1, 2, wo, 2 * c1),
                         lambda bn, bi: (bn, jnp.maximum(bi * th - 1, 0), 0, 0, 0)),
            pl.BlockSpec((c1, c2), lambda bn, bi: (0, 0)),            # w1 (scale folded)
            pl.BlockSpec((c1, c2), lambda bn, bi: (0, 0)),            # w2 (scale folded)
            pl.BlockSpec((3, 3 * c2, c2), lambda bn, bi: (0, 0, 0)),  # w3 fused-K taps
            pl.BlockSpec((3, c2), lambda bn, bi: (0, 0)),             # packed biases
        ],
        out_specs=pl.BlockSpec((1, th, wo, 2 * c2), lambda bn, bi: (bn, bi, 0, 0)),
        compiler_params=pltpu.CompilerParams(
            dimension_semantics=("parallel", "parallel"),
            vmem_limit_bytes=vmem_limit),
        cost_estimate=pl.CostEstimate(flops=flops,
                                      transcendentals=transcendentals,
                                      bytes_accessed=bytes_accessed),
    )(xr, xr, p["w1"], p["w2"], p["w3"], p["bias"])


def transition_block(x_nchw, p, *, tile_rows=64, out_dtype=jnp.float32):
    """NCHW in / NCHW out, matching the PyTorch module. Prefer the NHWC entry
    point when the surrounding graph is NHWC (drops both boundary transposes)."""
    x = jnp.transpose(x_nchw, (0, 2, 3, 1))                  # NCHW -> NHWC
    y = transition_block_nhwc(x, p, tile_rows=tile_rows, out_dtype=out_dtype)
    return jnp.transpose(y, (0, 3, 1, 2))                    # NHWC -> NCHW


# ----------------------------------------------------------------------------
# Deterministic parameters (eval-mode BN folded into per-channel scale/bias;
# scales additionally folded into the bf16 kernel weights, in f32)
# ----------------------------------------------------------------------------
def make_params(key, c1, c2, eps=1e-3):
    ks = jax.random.split(key, 15)

    def bn_fold(kg, kb, km, kv, c):
        gamma = 1.0 + 0.1 * jax.random.normal(kg, (c,), jnp.float32)
        beta = 0.1 * jax.random.normal(kb, (c,), jnp.float32)
        mean = 0.1 * jax.random.normal(km, (c,), jnp.float32)
        var = jax.random.uniform(kv, (c,), jnp.float32, 0.5, 1.5)
        scale = gamma / jnp.sqrt(var + eps)
        bias = beta - mean * scale
        return scale.reshape(1, c), bias.reshape(1, c)

    w1 = 0.2 * jax.random.normal(ks[0], (c2, c1, 1, 1), jnp.float32)   # OIHW
    w2 = 0.2 * jax.random.normal(ks[1], (c2, c1, 1, 1), jnp.float32)
    w3 = 0.2 * jax.random.normal(ks[2], (c2, c2, 3, 3), jnp.float32)
    s1, b1 = bn_fold(ks[3], ks[4], ks[5], ks[6], c2)
    s2, b2 = bn_fold(ks[7], ks[8], ks[9], ks[10], c2)
    s3, b3 = bn_fold(ks[11], ks[12], ks[13], ks[14], c2)

    bf16 = jnp.bfloat16
    # kernel layouts: BN scale folded into the output-channel axis (in f32),
    # then cast to bf16 for the MXU; cv3 taps re-laid-out to (dy, 3*Ci, Co)
    # so each dy is a single K=3*C2 contraction.
    w1_k = (w1[:, :, 0, 0].T * s1).astype(bf16)                          # (C1, C2)
    w2_k = (w2[:, :, 0, 0].T * s2).astype(bf16)                          # (C1, C2)
    w3_k = (jnp.transpose(w3, (2, 3, 1, 0)) * s3.reshape(1, 1, 1, c2))   # (ky,kx,Ci,Co)
    w3_k = w3_k.reshape(3, 3 * c2, c2).astype(bf16)                      # (3, 3*Ci, Co)
    bias = jnp.concatenate([b1, b2, b3], axis=0)                         # (3, C2) f32

    return {
        "w1": w1_k, "w2": w2_k, "w3": w3_k, "bias": bias,
        # original OIHW f32 weights + unfolded BN for the pure-JAX reference
        "w1_oihw": w1, "w2_oihw": w2, "w3_oihw": w3,
        "s1": s1, "b1": b1, "s2": s2, "b2": b2, "s3": s3, "b3": b3,
    }


def ref_forward(x, p):
    """Pure-JAX NCHW reference of the PyTorch module (eval mode). Matmul inputs
    are cast to bf16 with f32 accumulation, matching the kernel's MXU path."""
    bf16 = jnp.bfloat16

    def conv_bn_silu(v, w, scale, bias, stride, pad):
        y = lax.conv_general_dilated(
            v.astype(bf16), w.astype(bf16), (stride, stride),
            [(pad, pad), (pad, pad)],
            dimension_numbers=("NCHW", "OIHW", "NCHW"),
            preferred_element_type=jnp.float32)
        y = y * scale.reshape(1, -1, 1, 1) + bias.reshape(1, -1, 1, 1)
        return y * jax.nn.sigmoid(y)

    x1 = lax.reduce_window(x, -jnp.inf, lax.max, (1, 1, 2, 2), (1, 1, 2, 2), "VALID")
    x1 = conv_bn_silu(x1, p["w1_oihw"], p["s1"], p["b1"], 1, 0)
    x2 = conv_bn_silu(x, p["w2_oihw"], p["s2"], p["b2"], 1, 0)
    x2 = conv_bn_silu(x2, p["w3_oihw"], p["s3"], p["b3"], 2, 1)
    return jnp.concatenate([x2, x1], axis=1)


if __name__ == "__main__":
    key = jax.random.PRNGKey(0)
    kx, kp = jax.random.split(key)

    N, C1, H, W = 2, 4, 16, 16
    C2 = 8
    x = jax.random.normal(kx, (N, C1, H, W), jnp.float32)
    params = make_params(kp, C1, C2)

    # tile_rows=4 -> two row tiles per image: exercises the halo path as well.
    fwd = jax.jit(lambda xx, pp: transition_block(xx, pp, tile_rows=4))
    out = fwd(x, params)
    out = jax.block_until_ready(out)

    assert out.shape == (N, 2 * C2, H // 2, W // 2), out.shape

    ref = ref_forward(x, params)
    max_err = float(jnp.max(jnp.abs(out - ref)))
    assert jnp.allclose(out, ref, atol=3e-2, rtol=3e-2), max_err

    print("KERNEL_OK")
</pallas_src>

<mosaic_0001>
module attributes {stable_mosaic.version = 11 : i64} {
  func.func @transition_kernel(%arg0: i32, %arg1: i32, %arg2: memref<1x4x2x8x8xbf16, #tpu.memory_space<vmem>>, %arg3: memref<1x1x2x8x8xbf16, #tpu.memory_space<vmem>>, %arg4: memref<4x8xbf16, #tpu.memory_space<vmem>>, %arg5: memref<4x8xbf16, #tpu.memory_space<vmem>>, %arg6: memref<3x24x8xbf16, #tpu.memory_space<vmem>>, %arg7: memref<3x8xf32, #tpu.memory_space<vmem>>, %arg8: memref<1x4x8x16xf32, #tpu.memory_space<vmem>>) attributes {dimension_semantics = [#tpu.dimension_semantics<parallel>, #tpu.dimension_semantics<parallel>], iteration_bounds = array<i64: 2, 2>, scalar_prefetch = 0 : i64, scratch_operands = 0 : i64, tpu.core_type = #tpu.core_type<tc>, window_params = [{transform_indices = @transform_0, window_bounds = array<i64: 1, 4, 2, 8, 8>}, {transform_indices = @transform_1, window_bounds = array<i64: 1, 1, 2, 8, 8>}, {pipeline_mode = #tpu.pipeline_mode<synchronous>, transform_indices = @transform_2, window_bounds = array<i64: 4, 8>}, {pipeline_mode = #tpu.pipeline_mode<synchronous>, transform_indices = @transform_3, window_bounds = array<i64: 4, 8>}, {pipeline_mode = #tpu.pipeline_mode<synchronous>, transform_indices = @transform_4, window_bounds = array<i64: 3, 24, 8>}, {pipeline_mode = #tpu.pipeline_mode<synchronous>, transform_indices = @transform_5, window_bounds = array<i64: 3, 8>}, {transform_indices = @transform_6, window_bounds = array<i64: 1, 4, 8, 16>}]} {
    %c0 = arith.constant 0 : index
    %c0_0 = arith.constant 0 : index
    %c0_1 = arith.constant 0 : index
    %c0_2 = arith.constant 0 : index
    %c0_3 = arith.constant 0 : index
    %0 = vector.load %arg2[%c0, %c0_0, %c0_1, %c0_2, %c0_3] : memref<1x4x2x8x8xbf16, #tpu.memory_space<vmem>>, vector<1x4x2x8x8xbf16>
    %1 = vector.shape_cast %0 : vector<1x4x2x8x8xbf16> to vector<4x2x8x8xbf16>
    %c0_4 = arith.constant 0 : index
    %c0_5 = arith.constant 0 : index
    %c0_6 = arith.constant 0 : index
    %c0_7 = arith.constant 0 : index
    %c0_8 = arith.constant 0 : index
    %2 = vector.load %arg3[%c0_4, %c0_5, %c0_6, %c0_7, %c0_8] : memref<1x1x2x8x8xbf16, #tpu.memory_space<vmem>>, vector<1x1x2x8x8xbf16>
    %3 = vector.extract_strided_slice %2 {offsets = [0, 0, 1, 0, 0], sizes = [1, 1, 1, 8, 8], strides = [1, 1, 1, 1, 1]} : vector<1x1x2x8x8xbf16> to vector<1x1x1x8x8xbf16>
    %4 = vector.shape_cast %3 : vector<1x1x1x8x8xbf16> to vector<8x8xbf16>
    %c0_9 = arith.constant 0 : index
    %c0_10 = arith.constant 0 : index
    %5 = vector.load %arg7[%c0_9, %c0_10] : memref<3x8xf32, #tpu.memory_space<vmem>>, vector<3x8xf32>
    %6 = vector.extract_strided_slice %5 {offsets = [0, 0], sizes = [1, 8], strides = [1, 1]} : vector<3x8xf32> to vector<1x8xf32>
    %7 = vector.extract_strided_slice %5 {offsets = [1, 0], sizes = [1, 8], strides = [1, 1]} : vector<3x8xf32> to vector<1x8xf32>
    %8 = vector.extract_strided_slice %5 {offsets = [2, 0], sizes = [1, 8], strides = [1, 1]} : vector<3x8xf32> to vector<1x8xf32>
    %9 = vector.extract_strided_slice %1 {offsets = [0, 0, 0, 0], sizes = [4, 1, 8, 8], strides = [1, 1, 1, 1]} : vector<4x2x8x8xbf16> to vector<4x1x8x8xbf16>
    %10 = vector.shape_cast %9 : vector<4x1x8x8xbf16> to vector<4x8x8xbf16>
    %11 = vector.extract_strided_slice %1 {offsets = [0, 1, 0, 0], sizes = [4, 1, 8, 8], strides = [1, 1, 1, 1]} : vector<4x2x8x8xbf16> to vector<4x1x8x8xbf16>
    %12 = vector.shape_cast %11 : vector<4x1x8x8xbf16> to vector<4x8x8xbf16>
    %13 = arith.maximumf %10, %12 : vector<4x8x8xbf16>
    %14 = vector.extract_strided_slice %13 {offsets = [0, 0, 0], sizes = [4, 8, 4], strides = [1, 1, 1]} : vector<4x8x8xbf16> to vector<4x8x4xbf16>
    %15 = vector.extract_strided_slice %13 {offsets = [0, 0, 4], sizes = [4, 8, 4], strides = [1, 1, 1]} : vector<4x8x8xbf16> to vector<4x8x4xbf16>
    %16 = arith.maximumf %14, %15 : vector<4x8x4xbf16>
    %17 = vector.shape_cast %16 : vector<4x8x4xbf16> to vector<32x4xbf16>
    %c0_11 = arith.constant 0 : index
    %c0_12 = arith.constant 0 : index
    %18 = vector.load %arg4[%c0_11, %c0_12] : memref<4x8xbf16, #tpu.memory_space<vmem>>, vector<4x8xbf16>
    %cst = arith.constant dense<0.000000e+00> : vector<32x8xf32>
    %19 = tpu.matmul %17, %18, %cst {dimension_numbers = #tpu.dot_dimension_numbers<[1], [0], [0], [1], [0, 0, 1, 1], [], []>} : vector<32x4xbf16>, vector<4x8xbf16>, vector<32x8xf32> -> vector<32x8xf32>
    %20 = vector.broadcast %6 : vector<1x8xf32> to vector<32x8xf32>
    %21 = arith.addf %19, %20 : vector<32x8xf32>
    %22 = arith.negf %21 : vector<32x8xf32>
    %23 = math.exp %22 : vector<32x8xf32>
    %cst_13 = arith.constant 1.000000e+00 : f32
    %24 = vector.broadcast %cst_13 : f32 to vector<32x8xf32>
    %25 = arith.addf %24, %23 : vector<32x8xf32>
    %26 = arith.divf %24, %25 : vector<32x8xf32>
    %27 = arith.mulf %21, %26 : vector<32x8xf32>
    %28 = vector.extract_strided_slice %1 {offsets = [0, 0, 0, 0], sizes = [4, 1, 8, 8], strides = [1, 1, 1, 1]} : vector<4x2x8x8xbf16> to vector<4x1x8x8xbf16>
    %29 = vector.shape_cast %28 : vector<4x1x8x8xbf16> to vector<4x8x8xbf16>
    %30 = vector.extract_strided_slice %1 {offsets = [0, 1, 0, 0], sizes = [4, 1, 8, 8], strides = [1, 1, 1, 1]} : vector<4x2x8x8xbf16> to vector<4x1x8x8xbf16>
    %31 = vector.shape_cast %30 : vector<4x1x8x8xbf16> to vector<4x8x8xbf16>
    %32 = vector.extract_strided_slice %29 {offsets = [0, 0, 0], sizes = [4, 8, 4], strides = [1, 1, 1]} : vector<4x8x8xbf16> to vector<4x8x4xbf16>
    %33 = vector.extract_strided_slice %29 {offsets = [0, 0, 4], sizes = [4, 8, 4], strides = [1, 1, 1]} : vector<4x8x8xbf16> to vector<4x8x4xbf16>
    %34 = vector.extract_strided_slice %31 {offsets = [0, 0, 0], sizes = [4, 8, 4], strides = [1, 1, 1]} : vector<4x8x8xbf16> to vector<4x8x4xbf16>
    %35 = vector.extract_strided_slice %31 {offsets = [0, 0, 4], sizes = [4, 8, 4], strides = [1, 1, 1]} : vector<4x8x8xbf16> to vector<4x8x4xbf16>
    %36 = vector.extract_strided_slice %4 {offsets = [0, 0], sizes = [8, 4], strides = [1, 1]} : vector<8x8xbf16> to vector<8x4xbf16>
    %37 = vector.shape_cast %36 : vector<8x4xbf16> to vector<1x8x4xbf16>
    %38 = vector.extract_strided_slice %4 {offsets = [0, 4], sizes = [8, 4], strides = [1, 1]} : vector<8x8xbf16> to vector<8x4xbf16>
    %39 = vector.shape_cast %38 : vector<8x4xbf16> to vector<1x8x4xbf16>
    %40 = tpu.concatenate %32, %33, %34, %35, %37, %39 in 0 : vector<4x8x4xbf16>, vector<4x8x4xbf16>, vector<4x8x4xbf16>, vector<4x8x4xbf16>, vector<1x8x4xbf16>, vector<1x8x4xbf16> -> vector<18x8x4xbf16>
    %41 = vector.shape_cast %40 : vector<18x8x4xbf16> to vector<144x4xbf16>
    %c0_14 = arith.constant 0 : index
    %c0_15 = arith.constant 0 : index
    %42 = vector.load %arg5[%c0_14, %c0_15] : memref<4x8xbf16, #tpu.memory_space<vmem>>, vector<4x8xbf16>
    %cst_16 = arith.constant dense<0.000000e+00> : vector<144x8xf32>
    %43 = tpu.matmul %41, %42, %cst_16 {dimension_numbers = #tpu.dot_dimension_numbers<[1], [0], [0], [1], [0, 0, 1, 1], [], []>} : vector<144x4xbf16>, vector<4x8xbf16>, vector<144x8xf32> -> vector<144x8xf32>
    %44 = vector.broadcast %7 : vector<1x8xf32> to vector<144x8xf32>
    %45 = arith.addf %43, %44 : vector<144x8xf32>
    %46 = arith.negf %45 : vector<144x8xf32>
    %47 = math.exp %46 : vector<144x8xf32>
    %cst_17 = arith.constant 1.000000e+00 : f32
    %48 = vector.broadcast %cst_17 : f32 to vector<144x8xf32>
    %49 = arith.addf %48, %47 : vector<144x8xf32>
    %50 = arith.divf %48, %49 : vector<144x8xf32>
    %51 = arith.mulf %45, %50 : vector<144x8xf32>
    %52 = vector.shape_cast %51 : vector<144x8xf32> to vector<18x8x8xf32>
    %c0_i32 = arith.constant 0 : i32
    %53 = arith.cmpi sgt, %arg1, %c0_i32 : i32
    %54 = arith.extui %53 : i1 to i32
    %55 = arith.sitofp %54 : i32 to f32
    %56 = vector.extract_strided_slice %52 {offsets = [16, 0, 0], sizes = [1, 8, 8], strides = [1, 1, 1]} : vector<18x8x8xf32> to vector<1x8x8xf32>
    %57 = vector.broadcast %55 : f32 to vector<1x8x8xf32>
    %58 = arith.mulf %56, %57 : vector<1x8x8xf32>
    %59 = arith.truncf %58 : vector<1x8x8xf32> to vector<1x8x8xbf16>
    %60 = vector.extract_strided_slice %52 {offsets = [17, 0, 0], sizes = [1, 8, 8], strides = [1, 1, 1]} : vector<18x8x8xf32> to vector<1x8x8xf32>
    %61 = vector.broadcast %55 : f32 to vector<1x8x8xf32>
    %62 = arith.mulf %60, %61 : vector<1x8x8xf32>
    %63 = arith.truncf %62 : vector<1x8x8xf32> to vector<1x8x8xbf16>
    %64 = vector.extract_strided_slice %52 {offsets = [0, 0, 0], sizes = [16, 8, 8], strides = [1, 1, 1]} : vector<18x8x8xf32> to vector<16x8x8xf32>
    %65 = arith.truncf %64 : vector<16x8x8xf32> to vector<16x8x8xbf16>
    %66 = vector.extract_strided_slice %65 {offsets = [0, 0, 0], sizes = [4, 8, 8], strides = [1, 1, 1]} : vector<16x8x8xbf16> to vector<4x8x8xbf16>
    %67 = vector.extract_strided_slice %65 {offsets = [4, 0, 0], sizes = [4, 8, 8], strides = [1, 1, 1]} : vector<16x8x8xbf16> to vector<4x8x8xbf16>
    %68 = vector.extract_strided_slice %65 {offsets = [8, 0, 0], sizes = [4, 8, 8], strides = [1, 1, 1]} : vector<16x8x8xbf16> to vector<4x8x8xbf16>
    %69 = vector.extract_strided_slice %65 {offsets = [12, 0, 0], sizes = [4, 8, 8], strides = [1, 1, 1]} : vector<16x8x8xbf16> to vector<4x8x8xbf16>
    %70 = vector.extract_strided_slice %68 {offsets = [0, 0, 0], sizes = [3, 8, 8], strides = [1, 1, 1]} : vector<4x8x8xbf16> to vector<3x8x8xbf16>
    %71 = tpu.concatenate %59, %70 in 0 : vector<1x8x8xbf16>, vector<3x8x8xbf16> -> vector<4x8x8xbf16>
    %72 = vector.extract_strided_slice %69 {offsets = [0, 0, 0], sizes = [3, 8, 8], strides = [1, 1, 1]} : vector<4x8x8xbf16> to vector<3x8x8xbf16>
    %73 = tpu.concatenate %63, %72 in 0 : vector<1x8x8xbf16>, vector<3x8x8xbf16> -> vector<4x8x8xbf16>
    %c0_18 = arith.constant 0 : index
    %c0_19 = arith.constant 0 : index
    %c0_20 = arith.constant 0 : index
    %74 = vector.load %arg6[%c0_18, %c0_19, %c0_20] : memref<3x24x8xbf16, #tpu.memory_space<vmem>>, vector<3x24x8xbf16>
    %cst_21 = arith.constant 0.000000e+00 : bf16
    %75 = vector.broadcast %cst_21 : bf16 to vector<4x1x8xbf16>
    %76 = vector.extract_strided_slice %73 {offsets = [0, 0, 0], sizes = [4, 7, 8], strides = [1, 1, 1]} : vector<4x8x8xbf16> to vector<4x7x8xbf16>
    %77 = tpu.concatenate %75, %76 in 1 : vector<4x1x8xbf16>, vector<4x7x8xbf16> -> vector<4x8x8xbf16>
    %78 = tpu.concatenate %77, %71, %73 in 2 : vector<4x8x8xbf16>, vector<4x8x8xbf16>, vector<4x8x8xbf16> -> vector<4x8x24xbf16>
    %79 = vector.shape_cast %78 : vector<4x8x24xbf16> to vector<32x24xbf16>
    %80 = vector.extract_strided_slice %74 {offsets = [0, 0, 0], sizes = [1, 24, 8], strides = [1, 1, 1]} : vector<3x24x8xbf16> to vector<1x24x8xbf16>
    %81 = vector.shape_cast %80 : vector<1x24x8xbf16> to vector<24x8xbf16>
    %cst_22 = arith.constant dense<0.000000e+00> : vector<32x8xf32>
    %82 = tpu.matmul %79, %81, %cst_22 {dimension_numbers = #tpu.dot_dimension_numbers<[1], [0], [0], [1], [0, 0, 1, 1], [], []>} : vector<32x24xbf16>, vector<24x8xbf16>, vector<32x8xf32> -> vector<32x8xf32>
    %83 = vector.extract_strided_slice %67 {offsets = [0, 0, 0], sizes = [4, 7, 8], strides = [1, 1, 1]} : vector<4x8x8xbf16> to vector<4x7x8xbf16>
    %84 = tpu.concatenate %75, %83 in 1 : vector<4x1x8xbf16>, vector<4x7x8xbf16> -> vector<4x8x8xbf16>
    %85 = tpu.concatenate %84, %66, %67 in 2 : vector<4x8x8xbf16>, vector<4x8x8xbf16>, vector<4x8x8xbf16> -> vector<4x8x24xbf16>
    %86 = vector.shape_cast %85 : vector<4x8x24xbf16> to vector<32x24xbf16>
    %87 = vector.extract_strided_slice %74 {offsets = [1, 0, 0], sizes = [1, 24, 8], strides = [1, 1, 1]} : vector<3x24x8xbf16> to vector<1x24x8xbf16>
    %88 = vector.shape_cast %87 : vector<1x24x8xbf16> to vector<24x8xbf16>
    %cst_23 = arith.constant dense<0.000000e+00> : vector<32x8xf32>
    %89 = tpu.matmul %86, %88, %cst_23 {dimension_numbers = #tpu.dot_dimension_numbers<[1], [0], [0], [1], [0, 0, 1, 1], [], []>} : vector<32x24xbf16>, vector<24x8xbf16>, vector<32x8xf32> -> vector<32x8xf32>
    %90 = arith.addf %82, %89 : vector<32x8xf32>
    %91 = vector.extract_strided_slice %69 {offsets = [0, 0, 0], sizes = [4, 7, 8], strides = [1, 1, 1]} : vector<4x8x8xbf16> to vector<4x7x8xbf16>
    %92 = tpu.concatenate %75, %91 in 1 : vector<4x1x8xbf16>, vector<4x7x8xbf16> -> vector<4x8x8xbf16>
    %93 = tpu.concatenate %92, %68, %69 in 2 : vector<4x8x8xbf16>, vector<4x8x8xbf16>, vector<4x8x8xbf16> -> vector<4x8x24xbf16>
    %94 = vector.shape_cast %93 : vector<4x8x24xbf16> to vector<32x24xbf16>
    %95 = vector.extract_strided_slice %74 {offsets = [2, 0, 0], sizes = [1, 24, 8], strides = [1, 1, 1]} : vector<3x24x8xbf16> to vector<1x24x8xbf16>
    %96 = vector.shape_cast %95 : vector<1x24x8xbf16> to vector<24x8xbf16>
    %cst_24 = arith.constant dense<0.000000e+00> : vector<32x8xf32>
    %97 = tpu.matmul %94, %96, %cst_24 {dimension_numbers = #tpu.dot_dimension_numbers<[1], [0], [0], [1], [0, 0, 1, 1], [], []>} : vector<32x24xbf16>, vector<24x8xbf16>, vector<32x8xf32> -> vector<32x8xf32>
    %98 = arith.addf %90, %97 : vector<32x8xf32>
    %99 = vector.broadcast %8 : vector<1x8xf32> to vector<32x8xf32>
    %100 = arith.addf %98, %99 : vector<32x8xf32>
    %101 = arith.negf %100 : vector<32x8xf32>
    %102 = math.exp %101 : vector<32x8xf32>
    %cst_25 = arith.constant 1.000000e+00 : f32
    %103 = vector.broadcast %cst_25 : f32 to vector<32x8xf32>
    %104 = arith.addf %103, %102 : vector<32x8xf32>
    %105 = arith.divf %103, %104 : vector<32x8xf32>
    %106 = arith.mulf %100, %105 : vector<32x8xf32>
    %107 = vector.shape_cast %106 : vector<32x8xf32> to vector<4x8x8xf32>
    %108 = vector.shape_cast %27 : vector<32x8xf32> to vector<4x8x8xf32>
    %109 = tpu.concatenate %107, %108 in 2 : vector<4x8x8xf32>, vector<4x8x8xf32> -> vector<4x8x16xf32>
    %110 = vector.shape_cast %109 : vector<4x8x16xf32> to vector<1x4x8x16xf32>
    %c0_26 = arith.constant 0 : index
    %c0_27 = arith.constant 0 : index
    %c0_28 = arith.constant 0 : index
    %c0_29 = arith.constant 0 : index
    %111 = vector.load %arg8[%c0_26, %c0_27, %c0_28, %c0_29] : memref<1x4x8x16xf32, #tpu.memory_space<vmem>>, vector<1x4x8x16xf32>
    tpu.vector_store %arg8[%c0_26, %c0_27, %c0_28, %c0_29], %110 {strides = array<i32>} : memref<1x4x8x16xf32, #tpu.memory_space<vmem>>, vector<1x4x8x16xf32>,
    return
  }
  func.func @transform_0(%arg0: i32, %arg1: i32) -> (i32, i32, i32, i32, i32) {
    %c0_i32 = arith.constant 0 : i32
    %c0_i32_0 = arith.constant 0 : i32
    %c0_i32_1 = arith.constant 0 : i32
    %c0_i32_2 = arith.constant 0 : i32
    return %arg0, %arg1, %c0_i32, %c0_i32_0, %c0_i32_1 : i32, i32, i32, i32, i32
  }
  func.func @transform_1(%arg0: i32, %arg1: i32) -> (i32, i32, i32, i32, i32) {
    %c4_i32 = arith.constant 4 : i32
    %0 = arith.muli %arg1, %c4_i32 : i32
    %c1_i32 = arith.constant 1 : i32
    %1 = arith.subi %0, %c1_i32 : i32
    %c0_i32 = arith.constant 0 : i32
    %2 = arith.maxsi %1, %c0_i32 : i32
    %c0_i32_0 = arith.constant 0 : i32
    %c0_i32_1 = arith.constant 0 : i32
    %c0_i32_2 = arith.constant 0 : i32
    %c0_i32_3 = arith.constant 0 : i32
    return %arg0, %2, %c0_i32_0, %c0_i32_1, %c0_i32_2 : i32, i32, i32, i32, i32
  }
  func.func @transform_2(%arg0: i32, %arg1: i32) -> (i32, i32) {
    %c0_i32 = arith.constant 0 : i32
    %c0_i32_0 = arith.constant 0 : i32
    %c0_i32_1 = arith.constant 0 : i32
    return %c0_i32, %c0_i32_0 : i32, i32
  }
  func.func @transform_3(%arg0: i32, %arg1: i32) -> (i32, i32) {
    %c0_i32 = arith.constant 0 : i32
    %c0_i32_0 = arith.constant 0 : i32
    %c0_i32_1 = arith.constant 0 : i32
    return %c0_i32, %c0_i32_0 : i32, i32
  }
  func.func @transform_4(%arg0: i32, %arg1: i32) -> (i32, i32, i32) {
    %c0_i32 = arith.constant 0 : i32
    %c0_i32_0 = arith.constant 0 : i32
    %c0_i32_1 = arith.constant 0 : i32
    %c0_i32_2 = arith.constant 0 : i32
    return %c0_i32, %c0_i32_0, %c0_i32_1 : i32, i32, i32
  }
  func.func @transform_5(%arg0: i32, %arg1: i32) -> (i32, i32) {
    %c0_i32 = arith.constant 0 : i32
    %c0_i32_0 = arith.constant 0 : i32
    %c0_i32_1 = arith.constant 0 : i32
    return %c0_i32, %c0_i32_0 : i32, i32
  }
  func.func @transform_6(%arg0: i32, %arg1: i32) -> (i32, i32, i32, i32) {
    %c0_i32 = arith.constant 0 : i32
    %c0_i32_0 = arith.constant 0 : i32
    %c0_i32_1 = arith.constant 0 : i32
    return %arg0, %arg1, %c0_i32, %c0_i32_0 : i32, i32, i32, i32
  }
}

</mosaic_0001>

<llo_original>
// kernel: _lambda_.1
$region0: #{_lambda_.1}
  #allocation0 [shape = 'u32[]', space=smem, size = 0x4, offset = 0x4, fixed_abs, tag = 'smem constant byte address 0x4 - core index']
  #allocation1 [shape = 'u32[144,128]{1,0:T(1,128)}', space=vmem, size = 0x12000, scoped, tag = 'internal scratch']
  %s0 = inlined_call_operand.vmem [shape: bf16[2,8,2,8,8], index: 0, kind: input, shape index: {}, may-alias: {0,1}]
  %s1 = inlined_call_operand.vmem [shape: bf16[2,8,2,8,8], index: 1, kind: input, shape index: {}, may-alias: {0,1}]
  %s2 = inlined_call_operand.vmem [shape: bf16[4,8], index: 2, kind: input, shape index: {}]
  %s3 = inlined_call_operand.vmem [shape: bf16[4,8], index: 3, kind: input, shape index: {}]
  %s4 = inlined_call_operand.vmem [shape: bf16[3,24,8], index: 4, kind: input, shape index: {}]
  %s5 = inlined_call_operand.vmem [shape: f32[3,8], index: 5, kind: input, shape index: {}]
  %s6 = inlined_call_operand.hbm [shape: f32[2,8,8,16], index: 6, kind: output, shape index: {}]
  %s7 = sld [smem:[#allocation0]]
  $region57: #{_lambda_.1} parent=0
    _
  %s9 = ssub.s32 1, %s7
  %s10 = scalar_select 0, %s9, %s7
  $region1: #{_lambda_.1} parent=0
    #allocation2 [shape = 'u8[32768]{0}', space=vmem, size = 0x8000, scoped, tag = 'output window, operand 0']
    #allocation3 [shape = 's32[2]{0}', space=sflag, size = 0x8, scoped, tag = 'scoped memory for _lambda_.1']
    %11 = vsyncpa [#allocation3], 0
    %s12 = scalar_lea.sflag [#allocation3], 1
    %13 = vsyncpa %s12, 0
    loop: start=0, step=1, limit=6
    $region2: #{_lambda_.1} parent=1 // loop_pre_header
      _
    $region3: #{_lambda_.1} parent=1 // loop_header
      %s15 = sphi 0, %s19
      %p16 = scmp.ge.s32.totalorder %s15, 6
      %s22 = sphi 0, %s34
      %s23 = sphi 0, %s30
      %s24 = sphi 0, %s22
      %s25 = sphi 0, %s23
      %s26 = sphi 0, %s24
      %s27 = sphi 0, %s25
      %s39 = sphi 0, %s41
      %s42 = sphi 0, %s39
      %s43 = sphi 0, %s42
      %s59 = sphi 0, %s43
      %s75 = sphi 0, %s77
      %s78 = sphi 0, %s75
      %s79 = sphi 0, %s78
      %s95 = sphi 0, %s79
      %s99 = sphi 0, %s99
      %s101 = sphi 0, %s99
      %s102 = sphi 0, %s101
      %s116 = sphi 0, %s102
      %s120 = sphi 0, %s120
      %s122 = sphi 0, %s120
      %s123 = sphi 0, %s122
      %s137 = sphi 0, %s123
      %s141 = sphi 0, %s141
      %s143 = sphi 0, %s141
      %s144 = sphi 0, %s143
      %s158 = sphi 0, %s144
      %s162 = sphi 0, %s162
      %s164 = sphi 0, %s162
      %s165 = sphi 0, %s164
      %s179 = sphi 0, %s165
      %s187 = sphi 0, %s189
      %s190 = sphi 0, %s187
      %s191 = sphi 0, %s190
      %s207 = sphi 0, %s191
    $region4: #{_lambda_.1} parent=1 // loop_header_branch
      %18 = sbr.rel (%p16) target = $region8
    $region5: #{_lambda_.1} parent=1 // loop_body
      %s20 = ssub.s32 %s15, 1
      %s21 = ssub.s32 %s15, 2
      %s28 = sadd.s32 1, %s23
      %p29 = scmp.ge.s32.totalorder %s28, 2
      %s30 = scalar_select %p29, 0, %s28
      %s31 = sadd.s32 1, %s22
      %s32 = scalar_select %p29, %s31, %s22
      %p33 = scmp.ge.s32.totalorder %s32, 2
      %s34 = scalar_select %p33, 0, %s32
      %s35 = ssub.s32 %s22, %s34
      %s36 = ssub.s32 %s23, %s30
      %s37 = sor.u32 %s35, %s36
      %p38 = scmp.eq.s32.totalorder %s37, 0
      %s40 = sadd.s32 %s39, 1
      %s41 = scalar_select %p38, %s39, %s40
      %p44 = pneg %p38
      %p45 = scmp.eq.s32.totalorder %s15, 3
      %p46 = por %p44, %p45
      %p47 = scmp.ne.s32.totalorder %s39, %s42
      %p48 = scmp.eq.s32.totalorder %s15, 0
      %p49 = por %p47, %p48
      %p50 = scmp.ne.s32.totalorder %s39, %s42
      %p51 = scmp.eq.s32.totalorder %s20, 3
      %p52 = por %p50, %p51
      %p53 = scmp.ne.s32.totalorder %s42, %s43
      %p54 = scmp.eq.s32.totalorder %s20, 0
      %p55 = por %p53, %p54
      %p56 = scmp.ne.s32.totalorder %s42, %s43
      %p57 = scmp.eq.s32.totalorder %s21, 3
      %p58 = por %p56, %p57
      %p60 = scmp.ne.s32.totalorder %s43, %s59
      %p61 = scmp.eq.s32.totalorder %s21, 0
      %p62 = por %p60, %p61
      %s63 = smul.u32 %s23, 4
      %s64 = ssub.s32 %s63, 1
      %p65 = scmp.gt.s32.totalorder %s64, 0
      %s66 = scalar_select %p65, %s64, 0
      %s67 = smul.u32 %s30, 4
      %s68 = ssub.s32 %s67, 1
      %p69 = scmp.gt.s32.totalorder %s68, 0
      %s70 = scalar_select %p69, %s68, 0
      %s71 = ssub.s32 %s22, %s34
      %s72 = ssub.s32 %s66, %s70
      %s73 = sor.u32 %s71, %s72
      %p74 = scmp.eq.s32.totalorder %s73, 0
      %s76 = sadd.s32 %s75, 1
      %s77 = scalar_select %p74, %s75, %s76
      %p80 = pneg %p74
      %p81 = scmp.eq.s32.totalorder %s15, 3
      %p82 = por %p80, %p81
      %p83 = scmp.ne.s32.totalorder %s75, %s78
      %p84 = scmp.eq.s32.totalorder %s15, 0
      %p85 = por %p83, %p84
      %p86 = scmp.ne.s32.totalorder %s75, %s78
      %p87 = scmp.eq.s32.totalorder %s20, 3
      %p88 = por %p86, %p87
      %p89 = scmp.ne.s32.totalorder %s78, %s79
      %p90 = scmp.eq.s32.totalorder %s20, 0
      %p91 = por %p89, %p90
      %p92 = scmp.ne.s32.totalorder %s78, %s79
      %p93 = scmp.eq.s32.totalorder %s21, 3
      %p94 = por %p92, %p93
      %p96 = scmp.ne.s32.totalorder %s79, %s95
      %p97 = scmp.eq.s32.totalorder %s21, 0
      %p98 = por %p96, %p97
      %s100 = sadd.s32 %s99, 1
      %p103 = scmp.eq.s32.totalorder %s15, 3
      %p104 = scmp.ne.s32.totalorder %s99, %s101
      %p105 = scmp.eq.s32.totalorder %s15, 0
      %p106 = por %p104, %p105
      %p107 = scmp.ne.s32.totalorder %s99, %s101
      %p108 = scmp.eq.s32.totalorder %s20, 3
      %p109 = por %p107, %p108
      %p110 = scmp.ne.s32.totalorder %s101, %s102
      %p111 = scmp.eq.s32.totalorder %s20, 0
      %p112 = por %p110, %p111
      %p113 = scmp.ne.s32.totalorder %s101, %s102
      %p114 = scmp.eq.s32.totalorder %s21, 3
      %p115 = por %p113, %p114
      %p117 = scmp.ne.s32.totalorder %s102, %s116
      %p118 = scmp.eq.s32.totalorder %s21, 0
      %p119 = por %p117, %p118
      %s121 = sadd.s32 %s120, 1
      %p124 = scmp.eq.s32.totalorder %s15, 3
      %p125 = scmp.ne.s32.totalorder %s120, %s122
      %p126 = scmp.eq.s32.totalorder %s15, 0
      %p127 = por %p125, %p126
      %p128 = scmp.ne.s32.totalorder %s120, %s122
      %p129 = scmp.eq.s32.totalorder %s20, 3
      %p130 = por %p128, %p129
      %p131 = scmp.ne.s32.totalorder %s122, %s123
      %p132 = scmp.eq.s32.totalorder %s20, 0
      %p133 = por %p131, %p132
      %p134 = scmp.ne.s32.totalorder %s122, %s123
      %p135 = scmp.eq.s32.totalorder %s21, 3
      %p136 = por %p134, %p135
      %p138 = scmp.ne.s32.totalorder %s123, %s137
      %p139 = scmp.eq.s32.totalorder %s21, 0
      %p140 = por %p138, %p139
      %s142 = sadd.s32 %s141, 1
      %p145 = scmp.eq.s32.totalorder %s15, 3
      %p146 = scmp.ne.s32.totalorder %s141, %s143
      %p147 = scmp.eq.s32.totalorder %s15, 0
      %p148 = por %p146, %p147
      %p149 = scmp.ne.s32.totalorder %s141, %s143
      %p150 = scmp.eq.s32.totalorder %s20, 3
      %p151 = por %p149, %p150
      %p152 = scmp.ne.s32.totalorder %s143, %s144
      %p153 = scmp.eq.s32.totalorder %s20, 0
      %p154 = por %p152, %p153
      %p155 = scmp.ne.s32.totalorder %s143, %s144
      %p156 = scmp.eq.s32.totalorder %s21, 3
      %p157 = por %p155, %p156
      %p159 = scmp.ne.s32.totalorder %s144, %s158
      %p160 = scmp.eq.s32.totalorder %s21, 0
      %p161 = por %p159, %p160
      %s163 = sadd.s32 %s162, 1
      %p166 = scmp.eq.s32.totalorder %s15, 3
      %p167 = scmp.ne.s32.totalorder %s162, %s164
      %p168 = scmp.eq.s32.totalorder %s15, 0
      %p169 = por %p167, %p168
      %p170 = scmp.ne.s32.totalorder %s162, %s164
      %p171 = scmp.eq.s32.totalorder %s20, 3
      %p172 = por %p170, %p171
      %p173 = scmp.ne.s32.totalorder %s164, %s165
      %p174 = scmp.eq.s32.totalorder %s20, 0
      %p175 = por %p173, %p174
      %p176 = scmp.ne.s32.totalorder %s164, %s165
      %p177 = scmp.eq.s32.totalorder %s21, 3
      %p178 = por %p176, %p177
      %p180 = scmp.ne.s32.totalorder %s165, %s179
      %p181 = scmp.eq.s32.totalorder %s21, 0
      %p182 = por %p180, %p181
      %s183 = ssub.s32 %s22, %s34
      %s184 = ssub.s32 %s23, %s30
      %s185 = sor.u32 %s183, %s184
      %p186 = scmp.eq.s32.totalorder %s185, 0
      %s188 = sadd.s32 %s187, 1
      %s189 = scalar_select %p186, %s187, %s188
      %p192 = pneg %p186
      %p193 = scmp.eq.s32.totalorder %s15, 3
      %p194 = por %p192, %p193
      %p195 = scmp.ne.s32.totalorder %s187, %s190
      %p196 = scmp.eq.s32.totalorder %s15, 0
      %p197 = por %p195, %p196
      %p198 = scmp.ne.s32.totalorder %s187, %s190
      %p199 = scmp.eq.s32.totalorder %s20, 3
      %p200 = por %p198, %p199
      %p201 = scmp.ne.s32.totalorder %s190, %s191
      %p202 = scmp.eq.s32.totalorder %s20, 0
      %p203 = por %p201, %p202
      %p204 = scmp.ne.s32.totalorder %s190, %s191
      %p205 = scmp.eq.s32.totalorder %s21, 3
      %p206 = por %p204, %p205
      %p208 = scmp.ne.s32.totalorder %s191, %s207
      %p209 = scmp.eq.s32.totalorder %s21, 0
      %p210 = por %p208, %p209
      %p211 = scmp.le.s32.totalorder 1, %s15
      %p212 = scmp.lt.s32.totalorder %s15, 5
      %p213 = pnand %p211, %p212
      %p214 = pneg %p213
      // Predicated region
      $region9: #{_lambda_.1} parent=5 // pred_check
        _
      $region10: #{_lambda_.1} parent=5 // pred_check_branch
        %216 = sbr.rel (%p213) target = $region12
      $region11: #{_lambda_.1} parent=5 // pred_region
        %s217 = ssub.s32 %s15, 1
        // Predicated region
        $region13: #{_lambda_.1} parent=11 // pred_check
          %p218 = pneg %p112
        $region14: #{_lambda_.1} parent=11 // pred_check_branch
          %220 = sbr.rel (%p218) target = $region16
        $region15: #{_lambda_.1} parent=11 // pred_region
          _
        $region16: #{_lambda_.1} parent=11 // pred_fallthru
          _
        // Predicated region
        $region17: #{_lambda_.1} parent=11 // pred_check
          %p221 = pneg %p133
        $region18: #{_lambda_.1} parent=11 // pred_check_branch
          %223 = sbr.rel (%p221) target = $region20
        $region19: #{_lambda_.1} parent=11 // pred_region
          _
        $region20: #{_lambda_.1} parent=11 // pred_fallthru
          _
        // Predicated region
        $region21: #{_lambda_.1} parent=11 // pred_check
          %p224 = pneg %p154
        $region22: #{_lambda_.1} parent=11 // pred_check_branch
          %226 = sbr.rel (%p224) target = $region24
        $region23: #{_lambda_.1} parent=11 // pred_region
          _
        $region24: #{_lambda_.1} parent=11 // pred_fallthru
          _
        // Predicated region
        $region25: #{_lambda_.1} parent=11 // pred_check
          %p227 = pneg %p175
        $region26: #{_lambda_.1} parent=11 // pred_check_branch
          %229 = sbr.rel (%p227) target = $region28
        $region27: #{_lambda_.1} parent=11 // pred_region
          _
        $region28: #{_lambda_.1} parent=11 // pred_fallthru
          _
      $region12: #{_lambda_.1} parent=5 // pred_fallthru
        _
      %p230 = scmp.lt.s32.totalorder %s15, 4
      // Predicated region
      $region29: #{_lambda_.1} parent=5 // pred_check
        %p231 = pneg %p230
      $region30: #{_lambda_.1} parent=5 // pred_check_branch
        %233 = sbr.rel (%p231) target = $region32
      $region31: #{_lambda_.1} parent=5 // pred_region
        // Predicated region
        $region33: #{_lambda_.1} parent=31 // pred_check
          %p234 = pneg %p49
        $region34: #{_lambda_.1} parent=31 // pred_check_branch
          %236 = sbr.rel (%p234) target = $region36
        $region35: #{_lambda_.1} parent=31 // pred_region
          %s237 = smul.u32 4, %s23
          %p238 = scmp.lt.s32.totalorder %s22, 1
          %s239 = scalar_select %p238, %s22, 1
          %p240 = scmp.lt.s32.totalorder %s237, 7
          %s241 = scalar_select %p240, %s237, 7
          %s242 = smul.addr %s241, 2
          %s243 = smul.addr %s239, 16
          %s244 = sadd.s32 %s242, %s243
          %s245 = smul.addr %s244, 4
          %s246 = scalar_lea.vmem %s0, %s245
          %s247 = smul.u32 4, %s23
        $region36: #{_lambda_.1} parent=31 // pred_fallthru
          _
        // Predicated region
        $region37: #{_lambda_.1} parent=31 // pred_check
          %p248 = pneg %p85
        $region38: #{_lambda_.1} parent=31 // pred_check_branch
          %250 = sbr.rel (%p248) target = $region40
        $region39: #{_lambda_.1} parent=31 // pred_region
          %s251 = smul.u32 %s23, 4
          %s252 = ssub.s32 %s251, 1
          %p253 = scmp.gt.s32.totalorder %s252, 0
          %s254 = scalar_select %p253, %s252, 0
          %p255 = scmp.lt.s32.totalorder %s22, 1
          %s256 = scalar_select %p255, %s22, 1
          %p257 = scmp.lt.s32.totalorder %s254, 7
          %s258 = scalar_select %p257, %s254, 7
          %s259 = smul.addr %s258, 2
          %s260 = smul.addr %s256, 16
          %s261 = sadd.s32 %s259, %s260
          %s262 = smul.addr %s261, 4
          %s263 = scalar_lea.vmem %s1, %s262
          %s264 = smul.u32 %s23, 4
          %s265 = ssub.s32 %s264, 1
          %p266 = scmp.gt.s32.totalorder %s265, 0
          %s267 = scalar_select %p266, %s265, 0
        $region40: #{_lambda_.1} parent=31 // pred_fallthru
          _
      $region32: #{_lambda_.1} parent=5 // pred_fallthru
        _
      %p268 = scmp.le.s32.totalorder 1, %s15
      %p269 = scmp.lt.s32.totalorder %s15, 5
      %p270 = pnand %p268, %p269
      %p271 = pneg %p270
      // Predicated region
      $region41: #{_lambda_.1} parent=5 // pred_check
        _
      $region42: #{_lambda_.1} parent=5 // pred_check_branch
        %273 = sbr.rel (%p270) target = $region44
      $region43: #{_lambda_.1} parent=5 // pred_region
        %s274 = ssub.s32 %s15, 1
        %s275 = smul.u32 4, %s25
        %p276 = scmp.lt.s32.totalorder %s24, 1
        %s277 = scalar_select %p276, %s24, 1
        %p278 = scmp.lt.s32.totalorder %s275, 7
        %s279 = scalar_select %p278, %s275, 7
        %s280 = smul.addr %s279, 2
        %s281 = smul.addr %s277, 16
        %s282 = sadd.s32 %s280, %s281
        %s283 = smul.addr %s282, 4
        %s284 = scalar_lea.vmem %s0, %s283
        %p285 = pneg %p55
        %p286 = pneg %p52
        %s287 = smul.u32 %s25, 4
        %s288 = ssub.s32 %s287, 1
        %p289 = scmp.gt.s32.totalorder %s288, 0
        %s290 = scalar_select %p289, %s288, 0
        %p291 = scmp.lt.s32.totalorder %s24, 1
        %s292 = scalar_select %p291, %s24, 1
        %p293 = scmp.lt.s32.totalorder %s290, 7
        %s294 = scalar_select %p293, %s290, 7
        %s295 = smul.addr %s294, 2
        %s296 = smul.addr %s292, 16
        %s297 = sadd.s32 %s295, %s296
        %s298 = smul.addr %s297, 4
        %s299 = scalar_lea.vmem %s1, %s298
        %p300 = pneg %p91
        %p301 = pneg %p88
        %p302 = pneg %p112
        %p303 = pneg %p109
        %p304 = pneg %p133
        %p305 = pneg %p130
        %p306 = pneg %p154
        %p307 = pneg %p151
        %p308 = pneg %p175
        %p309 = pneg %p172
        %p310 = pneg %p203
        %p311 = pneg %p200
        %s312 = sand.u32 %s190, 1
        %s313 = scalar_lea.sflag [#allocation3], %s312
        %s314 = sand.u32 %s190, 1
        %s315 = smul.addr %s314, 32
        %s316 = scalar_lea.vmem [#allocation2], %s315
        %s317 = smul.u32 4, %s25
        %p318 = scmp.lt.s32.totalorder %s24, 1
        %s319 = scalar_select %p318, %s24, 1
        %p320 = scmp.lt.s32.totalorder %s317, 7
        %s321 = scalar_select %p320, %s317, 7
        %s322 = smul.addr %s321, 2
        %s323 = smul.addr %s319, 16
        %s324 = sadd.s32 %s322, %s323
        %s325 = smul.addr %s324, 4
        %s326 = scalar_lea.vmem %s0, %s325
        %s327 = smul.u32 4, %s25
        %s328 = smul.u32 %s25, 4
        %s329 = ssub.s32 %s328, 1
        %p330 = scmp.gt.s32.totalorder %s329, 0
        %s331 = scalar_select %p330, %s329, 0
        %p332 = scmp.lt.s32.totalorder %s24, 1
        %s333 = scalar_select %p332, %s24, 1
        %p334 = scmp.lt.s32.totalorder %s331, 7
        %s335 = scalar_select %p334, %s331, 7
        %s336 = smul.addr %s335, 2
        %s337 = smul.addr %s333, 16
        %s338 = sadd.s32 %s336, %s337
        %s339 = smul.addr %s338, 4
        %s340 = scalar_lea.vmem %s1, %s339
        %s341 = smul.u32 %s25, 4
        %s342 = ssub.s32 %s341, 1
        %p343 = scmp.gt.s32.totalorder %s342, 0
        %s344 = scalar_select %p343, %s342, 0
        %s345 = smul.u32 4, %s25
        %v347 = vld [vmem:[%s326] sm:$0xf]
        %v348 = vld [vmem:[%s326 + $0x4] sm:$0xf]
        %v349 = vld [vmem:[%s326 + $0x8] sm:$0xf]
        %v350 = vld [vmem:[%s326 + $0xc] sm:$0xf]
        %v351 = vld [vmem:[%s326 + $0x10] sm:$0xf]
        %v352 = vld [vmem:[%s326 + $0x14] sm:$0xf]
        %v353 = vld [vmem:[%s326 + $0x18] sm:$0xf]
        %v354 = vld [vmem:[%s326 + $0x1c] sm:$0xf]
        %v355 = vld [vmem:[%s340 + $0x4] sm:$0xf]
        %v356 = vld [vmem:[%s5] sm:$0x7]
        %v357 = vmax.bf16 %v347, %v348
        %v358 = vmax.bf16 %v349, %v350
        %v359 = vmax.bf16 %v351, %v352
        %v360 = vmax.bf16 %v353, %v354
        %365 = vrot.lane.b32.xlu0 %v357, 124
        %v366 = vpop.permute.xlu0 %365
        %367 = vrot.lane.b32.xlu0 %v358, 124
        %v368 = vpop.permute.xlu0 %367
        %369 = vrot.lane.b32.xlu0 %v359, 124
        %v370 = vpop.permute.xlu0 %369
        %371 = vrot.lane.b32.xlu0 %v360, 124
        %v372 = vpop.permute.xlu0 %371
        %v377 = vmax.bf16 %v357, %v366
        %v378 = vmax.bf16 %v358, %v368
        %v379 = vmax.bf16 %v359, %v370
        %v380 = vmax.bf16 %v360, %v372
        %v381 = vld [vmem:[%s2] sm:$0x3]
        %v382 = vlaneseq
        %v383 = vshrl.u32 %v382, 7
        %v384 = vsub.s32 0, %v383
        %v385 = vrot.slane %v356, %v384
        %v390 = vunpack.c.l.b16 %v377
        %v391 = vunpack.c.l.b16 %v378
        %v392 = vunpack.c.l.b16 %v379
        %v393 = vunpack.c.l.b16 %v380
        %v394 = vpack.c.b16 %v391, %v390
        %v395 = vpack.c.b16 %v393, %v392
        %vm396 = vcmask 31744
        %v398 = vsel %vm396, %v394, 0
        %v401 = vsel %vm396, %v395, 0
        %vm403 = vcmask 1041408
        %v405 = vsel %vm403, %v381, 0
        %407 = vmatprep.subr.bf16.mxu0 0
        %408 = vmatpush1.bf16.msra.mxu0 %v405
        %409 = vmatprep.subr.bf16.mxu0 0
        %410 = vmatpush1.bf16.msra.mxu0 0
        %411 = vmatprep.subr.bf16.mxu0 0
        %412 = vmatpush1.bf16.msra.mxu0 0
        %413 = vmatprep.subr.bf16.mxu0 0
        %414 = vmatpush1.bf16.msra.mxu0 0
        %415 = vmatprep.subr.bf16.mxu0 0
        %416 = vmatpush1.bf16.msra.mxu0 0
        %417 = vmatprep.subr.bf16.mxu0 0
        %418 = vmatpush1.bf16.msra.mxu0 0
        %419 = vmatprep.subr.bf16.mxu0 0
        %420 = vmatpush1.bf16.msra.mxu0 0
        %421 = vmatprep.subr.bf16.mxu0 0
        %422 = vmatpush1.bf16.msra.mxu0 0
        %423 = vmatprep.subr.bf16.mxu0 0
        %424 = vmatpush1.bf16.msra.mxu0 0
        %425 = vmatprep.subr.bf16.mxu0 0
        %426 = vmatpush1.bf16.msra.mxu0 0
        %427 = vmatprep.subr.bf16.mxu0 0
        %428 = vmatpush1.bf16.msra.mxu0 0
        %429 = vmatprep.subr.bf16.mxu0 0
        %430 = vmatpush1.bf16.msra.mxu0 0
        %431 = vmatprep.subr.bf16.mxu0 0
        %432 = vmatpush1.bf16.msra.mxu0 0
        %433 = vmatprep.subr.bf16.mxu0 0
        %434 = vmatpush1.bf16.msra.mxu0 0
        %435 = vmatprep.subr.bf16.mxu0 0
        %436 = vmatpush1.bf16.msra.mxu0 0
        %437 = vmatprep.subr.bf16.mxu0 0
        %438 = vmatpush1.bf16.msra.mxu0 0
        %439 = vmatprep.mubr.bf16.mxu0 0
        %440 = vmatmul.mubr.bf16.gmra.mrb[0].mxu0 %v398
        %v441 = vpop.f32.mrb[0].mxu0
        %v442 = vadd.f32 %v385, %v441
        %v443 = vpop.f32.mrb[0].mxu0
        %v444 = vpop.f32.mrb[0].mxu0
        %v445 = vadd.f32 %v385, %v444
        %v446 = vpop.f32.mrb[0].mxu0
        %447 = vmatprep.mubr.bf16.mxu0 0
        %448 = vmatmul.mubr.bf16.gmra.mrb[0].mxu0 %v401
        %v449 = vpop.f32.mrb[0].mxu0
        %v450 = vadd.f32 %v385, %v449
        %v451 = vpop.f32.mrb[0].mxu0
        %v452 = vpop.f32.mrb[0].mxu0
        %v453 = vadd.f32 %v385, %v452
        %v454 = vpop.f32.mrb[0].mxu0
        %455 = vdwg.mxu0
        %v456 = vxor.u32 %v442, 2147483648
        %v457 = vxor.u32 %v445, 2147483648
        %v458 = vxor.u32 %v450, 2147483648
        %v459 = vxor.u32 %v453, 2147483648
        %v460 = vmul.f32 %v456, 1.442695
        %v461 = vpow.pop %v460
        %v462 = vmul.f32 %v457, 1.442695
        %v463 = vpow.pop %v462
        %v464 = vmul.f32 %v458, 1.442695
        %v465 = vpow.pop %v464
        %v466 = vmul.f32 %v459, 1.442695
        %v467 = vpow.pop %v466
        %v468 = vadd.f32 %v461, 1.0
        %v469 = vadd.f32 %v463, 1.0
        %v470 = vadd.f32 %v465, 1.0
        %v471 = vadd.f32 %v467, 1.0
        %v472 = vrcp.pop %v468
        %v473 = vmul.f32 1.0, %v472
        %v474 = vrcp.pop %v469
        %v475 = vmul.f32 1.0, %v474
        %v476 = vrcp.pop %v470
        %v477 = vmul.f32 1.0, %v476
        %v478 = vrcp.pop %v471
        %v479 = vmul.f32 1.0, %v478
        %v480 = vmul.f32 %v442, %v473
        %v481 = vmul.f32 %v445, %v475
        %v482 = vmul.f32 %v450, %v477
        %v483 = vmul.f32 %v453, %v479
        %488 = vrot.lane.b32.xlu0 %v347, 124
        %v489 = vpop.permute.xlu0 %488
        %490 = vrot.lane.b32.xlu0 %v349, 124
        %v491 = vpop.permute.xlu0 %490
        %492 = vrot.lane.b32.xlu0 %v351, 124
        %v493 = vpop.permute.xlu0 %492
        %494 = vrot.lane.b32.xlu0 %v353, 124
        %v495 = vpop.permute.xlu0 %494
        %500 = vrot.lane.b32.xlu0 %v348, 124
        %v501 = vpop.permute.xlu0 %500
        %502 = vrot.lane.b32.xlu0 %v350, 124
        %v503 = vpop.permute.xlu0 %502
        %504 = vrot.lane.b32.xlu0 %v352, 124
        %v505 = vpop.permute.xlu0 %504
        %506 = vrot.lane.b32.xlu0 %v354, 124
        %v507 = vpop.permute.xlu0 %506
        %509 = vrot.lane.b32.xlu0 %v355, 124
        %v510 = vpop.permute.xlu0 %509
        %v511 = vld [vmem:[%s3] sm:$0x3]
        %v512 = vlaneseq
        %v513 = vshrl.u32 %v512, 7
        %v514 = vsub.s32 1, %v513
        %v515 = vrot.slane %v356, %v514
        %v516 = vunpack.c.l.b16 %v347
        %v517 = vunpack.c.l.b16 %v349
        %v518 = vunpack.c.l.b16 %v351
        %v519 = vunpack.c.l.b16 %v353
        %v520 = vunpack.c.l.b16 %v489
        %v521 = vunpack.c.l.b16 %v491
        %v522 = vunpack.c.l.b16 %v493
        %v523 = vunpack.c.l.b16 %v495
        %v524 = vunpack.c.l.b16 %v348
        %v525 = vunpack.c.l.b16 %v350
        %v526 = vunpack.c.l.b16 %v352
        %v527 = vunpack.c.l.b16 %v354
        %v528 = vunpack.c.l.b16 %v501
        %v529 = vunpack.c.l.b16 %v503
        %v530 = vunpack.c.l.b16 %v505
        %v531 = vunpack.c.l.b16 %v507
        %v532 = vunpack.c.l.b16 %v355
        %v533 = vunpack.c.l.b16 %v510
        %v534 = vpack.c.b16 %v517, %v516
        %v535 = vpack.c.b16 %v519, %v518
        %v536 = vpack.c.b16 %v521, %v520
        %v537 = vpack.c.b16 %v523, %v522
        %v538 = vpack.c.b16 %v525, %v524
        %v539 = vpack.c.b16 %v527, %v526
        %v540 = vpack.c.b16 %v529, %v528
        %v541 = vpack.c.b16 %v531, %v530
        %v542 = vpack.c.b16 %v533, %v532
        %v544 = vsel %vm396, %v534, 0
        %v547 = vsel %vm396, %v535, 0
        %v550 = vsel %vm396, %v536, 0
        %v553 = vsel %vm396, %v537, 0
        %v556 = vsel %vm396, %v538, 0
        %v559 = vsel %vm396, %v539, 0
        %v562 = vsel %vm396, %v540, 0
        %v565 = vsel %vm396, %v541, 0
        %v568 = vsel %vm396, %v542, 0
        %v571 = vsel %vm403, %v511, 0
        %573 = vmatprep.subr.bf16.mxu0 0
        %574 = vmatpush1.bf16.msra.mxu0 %v571
        %575 = vmatprep.subr.bf16.mxu0 0
        %576 = vmatpush1.bf16.msra.mxu0 0
        %577 = vmatprep.subr.bf16.mxu0 0
        %578 = vmatpush1.bf16.msra.mxu0 0
        %579 = vmatprep.subr.bf16.mxu0 0
        %580 = vmatpush1.bf16.msra.mxu0 0
        %581 = vmatprep.subr.bf16.mxu0 0
        %582 = vmatpush1.bf16.msra.mxu0 0
        %583 = vmatprep.subr.bf16.mxu0 0
        %584 = vmatpush1.bf16.msra.mxu0 0
        %585 = vmatprep.subr.bf16.mxu0 0
        %586 = vmatpush1.bf16.msra.mxu0 0
        %587 = vmatprep.subr.bf16.mxu0 0
        %588 = vmatpush1.bf16.msra.mxu0 0
        %589 = vmatprep.subr.bf16.mxu0 0
        %590 = vmatpush1.bf16.msra.mxu0 0
        %591 = vmatprep.subr.bf16.mxu0 0
        %592 = vmatpush1.bf16.msra.mxu0 0
        %593 = vmatprep.subr.bf16.mxu0 0
        %594 = vmatpush1.bf16.msra.mxu0 0
        %595 = vmatprep.subr.bf16.mxu0 0
        %596 = vmatpush1.bf16.msra.mxu0 0
        %597 = vmatprep.subr.bf16.mxu0 0
        %598 = vmatpush1.bf16.msra.mxu0 0
        %599 = vmatprep.subr.bf16.mxu0 0
        %600 = vmatpush1.bf16.msra.mxu0 0
        %601 = vmatprep.subr.bf16.mxu0 0
        %602 = vmatpush1.bf16.msra.mxu0 0
        %603 = vmatprep.subr.bf16.mxu0 0
        %604 = vmatpush1.bf16.msra.mxu0 0
        %605 = vmatprep.mubr.bf16.mxu0 0
        %606 = vmatmul.mubr.bf16.gmra.mrb[0].mxu0 %v544
        %v607 = vpop.f32.mrb[0].mxu0
        %v608 = vadd.f32 %v515, %v607
        %v609 = vpop.f32.mrb[0].mxu0
        %v610 = vpop.f32.mrb[0].mxu0
        %v611 = vadd.f32 %v515, %v610
        %v612 = vpop.f32.mrb[0].mxu0
        %613 = vmatprep.mubr.bf16.mxu0 0
        %614 = vmatmul.mubr.bf16.gmra.mrb[0].mxu0 %v547
        %v615 = vpop.f32.mrb[0].mxu0
        %v616 = vadd.f32 %v515, %v615
        %v617 = vpop.f32.mrb[0].mxu0
        %v618 = vpop.f32.mrb[0].mxu0
        %v619 = vadd.f32 %v515, %v618
        %v620 = vpop.f32.mrb[0].mxu0
        %621 = vmatprep.mubr.bf16.mxu0 0
        %622 = vmatmul.mubr.bf16.gmra.mrb[0].mxu0 %v550
        %v623 = vpop.f32.mrb[0].mxu0
        %v624 = vadd.f32 %v515, %v623
        %v625 = vpop.f32.mrb[0].mxu0
        %v626 = vpop.f32.mrb[0].mxu0
        %v627 = vadd.f32 %v515, %v626
        %v628 = vpop.f32.mrb[0].mxu0
        %629 = vmatprep.mubr.bf16.mxu0 0
        %630 = vmatmul.mubr.bf16.gmra.mrb[0].mxu0 %v553
        %v631 = vpop.f32.mrb[0].mxu0
        %v632 = vadd.f32 %v515, %v631
        %v633 = vpop.f32.mrb[0].mxu0
        %v634 = vpop.f32.mrb[0].mxu0
        %v635 = vadd.f32 %v515, %v634
        %v636 = vpop.f32.mrb[0].mxu0
        %637 = vmatprep.mubr.bf16.mxu0 0
        %638 = vmatmul.mubr.bf16.gmra.mrb[0].mxu0 %v556
        %v639 = vpop.f32.mrb[0].mxu0
        %v640 = vadd.f32 %v515, %v639
        %v641 = vpop.f32.mrb[0].mxu0
        %v642 = vpop.f32.mrb[0].mxu0
        %v643 = vadd.f32 %v515, %v642
        %v644 = vpop.f32.mrb[0].mxu0
        %645 = vmatprep.mubr.bf16.mxu0 0
        %646 = vmatmul.mubr.bf16.gmra.mrb[0].mxu0 %v559
        %v647 = vpop.f32.mrb[0].mxu0
        %v648 = vadd.f32 %v515, %v647
        %v649 = vpop.f32.mrb[0].mxu0
        %v650 = vpop.f32.mrb[0].mxu0
        %v651 = vadd.f32 %v515, %v650
        %v652 = vpop.f32.mrb[0].mxu0
        %653 = vmatprep.mubr.bf16.mxu0 0
        %654 = vmatmul.mubr.bf16.gmra.mrb[0].mxu0 %v562
        %v655 = vpop.f32.mrb[0].mxu0
        %v656 = vadd.f32 %v515, %v655
        %v657 = vpop.f32.mrb[0].mxu0
        %v658 = vpop.f32.mrb[0].mxu0
        %v659 = vadd.f32 %v515, %v658
        %v660 = vpop.f32.mrb[0].mxu0
        %661 = vmatprep.mubr.bf16.mxu0 0
        %662 = vmatmul.mubr.bf16.gmra.mrb[0].mxu0 %v565
        %v663 = vpop.f32.mrb[0].mxu0
        %v664 = vadd.f32 %v515, %v663
        %v665 = vpop.f32.mrb[0].mxu0
        %v666 = vpop.f32.mrb[0].mxu0
        %v667 = vadd.f32 %v515, %v666
        %v668 = vpop.f32.mrb[0].mxu0
        %669 = vmatprep.mubr.bf16.mxu0 0
        %670 = vmatmul.mubr.bf16.gmra.mrb[0].mxu0 %v568
        %v671 = vpop.f32.mrb[0].mxu0
        %v672 = vadd.f32 %v515, %v671
        %v673 = vpop.f32.mrb[0].mxu0
        %v674 = vpop.f32.mrb[0].mxu0
        %v675 = vadd.f32 %v515, %v674
        %v676 = vpop.f32.mrb[0].mxu0
        %677 = vdwg.mxu0
        %v678 = vxor.u32 %v608, 2147483648
        %v679 = vxor.u32 %v611, 2147483648
        %v680 = vxor.u32 %v616, 2147483648
        %v681 = vxor.u32 %v619, 2147483648
        %v682 = vxor.u32 %v624, 2147483648
        %v683 = vxor.u32 %v627, 2147483648
        %v684 = vxor.u32 %v632, 2147483648
        %v685 = vxor.u32 %v635, 2147483648
        %v686 = vxor.u32 %v640, 2147483648
        %v687 = vxor.u32 %v643, 2147483648
        %v688 = vxor.u32 %v648, 2147483648
        %v689 = vxor.u32 %v651, 2147483648
        %v690 = vxor.u32 %v656, 2147483648
        %v691 = vxor.u32 %v659, 2147483648
        %v692 = vxor.u32 %v664, 2147483648
        %v693 = vxor.u32 %v667, 2147483648
        %v694 = vxor.u32 %v672, 2147483648
        %v695 = vxor.u32 %v675, 2147483648
        %v696 = vmul.f32 %v678, 1.442695
        %v697 = vpow.pop %v696
        %v698 = vmul.f32 %v679, 1.442695
        %v699 = vpow.pop %v698
        %v700 = vmul.f32 %v680, 1.442695
        %v701 = vpow.pop %v700
        %v702 = vmul.f32 %v681, 1.442695
        %v703 = vpow.pop %v702
        %v704 = vmul.f32 %v682, 1.442695
        %v705 = vpow.pop %v704
        %v706 = vmul.f32 %v683, 1.442695
        %v707 = vpow.pop %v706
        %v708 = vmul.f32 %v684, 1.442695
        %v709 = vpow.pop %v708
        %v710 = vmul.f32 %v685, 1.442695
        %v711 = vpow.pop %v710
        %v712 = vmul.f32 %v686, 1.442695
        %v713 = vpow.pop %v712
        %v714 = vmul.f32 %v687, 1.442695
        %v715 = vpow.pop %v714
        %v716 = vmul.f32 %v688, 1.442695
        %v717 = vpow.pop %v716
        %v718 = vmul.f32 %v689, 1.442695
        %v719 = vpow.pop %v718
        %v720 = vmul.f32 %v690, 1.442695
        %v721 = vpow.pop %v720
        %v722 = vmul.f32 %v691, 1.442695
        %v723 = vpow.pop %v722
        %v724 = vmul.f32 %v692, 1.442695
        %v725 = vpow.pop %v724
        %v726 = vmul.f32 %v693, 1.442695
        %v727 = vpow.pop %v726
        %v728 = vmul.f32 %v694, 1.442695
        %v729 = vpow.pop %v728
        %v730 = vmul.f32 %v695, 1.442695
        %v731 = vpow.pop %v730
        %v732 = vadd.f32 %v697, 1.0
        %v733 = vadd.f32 %v699, 1.0
        %v734 = vadd.f32 %v701, 1.0
        %v735 = vadd.f32 %v703, 1.0
        %v736 = vadd.f32 %v705, 1.0
        %v737 = vadd.f32 %v707, 1.0
        %v738 = vadd.f32 %v709, 1.0
        %v739 = vadd.f32 %v711, 1.0
        %v740 = vadd.f32 %v713, 1.0
        %v741 = vadd.f32 %v715, 1.0
        %v742 = vadd.f32 %v717, 1.0
        %v743 = vadd.f32 %v719, 1.0
        %v744 = vadd.f32 %v721, 1.0
        %v745 = vadd.f32 %v723, 1.0
        %v746 = vadd.f32 %v725, 1.0
        %v747 = vadd.f32 %v727, 1.0
        %v748 = vadd.f32 %v729, 1.0
        %v749 = vadd.f32 %v731, 1.0
        %v750 = vrcp.pop %v732
        %v751 = vmul.f32 1.0, %v750
        %v752 = vrcp.pop %v733
        %v753 = vmul.f32 1.0, %v752
        %v754 = vrcp.pop %v734
        %v755 = vmul.f32 1.0, %v754
        %v756 = vrcp.pop %v735
        %v757 = vmul.f32 1.0, %v756
        %v758 = vrcp.pop %v736
        %v759 = vmul.f32 1.0, %v758
        %v760 = vrcp.pop %v737
        %v761 = vmul.f32 1.0, %v760
        %v762 = vrcp.pop %v738
        %v763 = vmul.f32 1.0, %v762
        %v764 = vrcp.pop %v739
        %v765 = vmul.f32 1.0, %v764
        %v766 = vrcp.pop %v740
        %v767 = vmul.f32 1.0, %v766
        %v768 = vrcp.pop %v741
        %v769 = vmul.f32 1.0, %v768
        %v770 = vrcp.pop %v742
        %v771 = vmul.f32 1.0, %v770
        %v772 = vrcp.pop %v743
        %v773 = vmul.f32 1.0, %v772
        %v774 = vrcp.pop %v744
        %v775 = vmul.f32 1.0, %v774
        %v776 = vrcp.pop %v745
        %v777 = vmul.f32 1.0, %v776
        %v778 = vrcp.pop %v746
        %v779 = vmul.f32 1.0, %v778
        %v780 = vrcp.pop %v747
        %v781 = vmul.f32 1.0, %v780
        %v782 = vrcp.pop %v748
        %v783 = vmul.f32 1.0, %v782
        %v784 = vrcp.pop %v749
        %v785 = vmul.f32 1.0, %v784
        %v786 = vmul.f32 %v608, %v751
        %v787 = vmul.f32 %v611, %v753
        %v788 = vmul.f32 %v616, %v755
        %v789 = vmul.f32 %v619, %v757
        %v790 = vmul.f32 %v624, %v759
        %v791 = vmul.f32 %v627, %v761
        %v792 = vmul.f32 %v632, %v763
        %v793 = vmul.f32 %v635, %v765
        %v794 = vmul.f32 %v640, %v767
        %v795 = vmul.f32 %v643, %v769
        %v796 = vmul.f32 %v648, %v771
        %v797 = vmul.f32 %v651, %v773
        %v798 = vmul.f32 %v656, %v775
        %v799 = vmul.f32 %v659, %v777
        %v800 = vmul.f32 %v664, %v779
        %v801 = vmul.f32 %v667, %v781
        %v802 = vmul.f32 %v672, %v783
        %v803 = vmul.f32 %v675, %v785
        %p804 = scmp.gt.s32.totalorder %s25, 0
        %s805 = scalar_select %p804, 1, 0
        %s806 = scvt.s32.f32 %s805
        %v807 = vstv %s806
        %v808 = vmul.f32 %v802, %v807
        %v809 = vpack.c.bf16 %v808, %v808
        %v810 = vmul.f32 %v803, %v807
        %v811 = vpack.c.bf16 %v810, %v810
        %v812 = vpack.c.bf16 %v786, %v786
        %v813 = vpack.c.bf16 %v787, %v787
        %v814 = vpack.c.bf16 %v788, %v788
        %v815 = vpack.c.bf16 %v789, %v789
        %v816 = vpack.c.bf16 %v790, %v790
        %v817 = vpack.c.bf16 %v791, %v791
        %v818 = vpack.c.bf16 %v792, %v792
        %v819 = vpack.c.bf16 %v793, %v793
        %v820 = vpack.c.bf16 %v794, %v794
        %v821 = vpack.c.bf16 %v795, %v795
        %v822 = vpack.c.bf16 %v796, %v796
        %v823 = vpack.c.bf16 %v797, %v797
        %v824 = vpack.c.bf16 %v798, %v798
        %v825 = vpack.c.bf16 %v799, %v799
        %v826 = vpack.c.bf16 %v800, %v800
        %v827 = vpack.c.bf16 %v801, %v801
        %v828 = vld [vmem:[%s4] sm:$0xf]
        %v829 = vld [vmem:[%s4 + $0x4] sm:$0xf]
        %v830 = vld [vmem:[%s4 + $0x8] sm:$0xf]
        %v831 = vld [vmem:[%s4 + $0xc] sm:$0xf]
        %v832 = vld [vmem:[%s4 + $0x10] sm:$0xf]
        %v833 = vld [vmem:[%s4 + $0x14] sm:$0xf]
        %v834 = vld [vmem:[%s4 + $0x18] sm:$0xf]
        %v835 = vld [vmem:[%s4 + $0x1c] sm:$0xf]
        %v836 = vld [vmem:[%s4 + $0x20] sm:$0xf]
        %v838 = vshrl.u32 %v811, 16
        %v840 = vrot.slane %v838, 7
        %v841 = vshll.u32 %v811, 16
        %v843 = vor.u32 %v840, %v841
        %v845 = vshrl.u32 %v824, 16
        %v847 = vrot.slane %v845, 7
        %v848 = vshll.u32 %v824, 16
        %v850 = vor.u32 %v847, %v848
        %v852 = vshrl.u32 %v825, 16
        %v854 = vrot.slane %v852, 7
        %v855 = vshll.u32 %v825, 16
        %v857 = vor.u32 %v854, %v855
        %v859 = vshrl.u32 %v826, 16
        %v861 = vrot.slane %v859, 7
        %v862 = vshll.u32 %v826, 16
        %v864 = vor.u32 %v861, %v862
        %vm869 = vcmask 1040384
        %vm870 = vsmask.f32 256
        %vm871 = vmand %vm869, %vm870
        %v872 = vsel %vm871, 0, %v843
        %v873 = vsel %vm871, 0, %v850
        %v874 = vsel %vm871, 0, %v857
        %v875 = vsel %vm871, 0, %v864
        %880 = vrot.lane.b32.xlu0 %v809, 8
        %v881 = vpop.permute.xlu0 %880
        %882 = vrot.lane.b32.xlu0 %v820, 8
        %v883 = vpop.permute.xlu0 %882
        %884 = vrot.lane.b32.xlu0 %v821, 8
        %v885 = vpop.permute.xlu0 %884
        %886 = vrot.lane.b32.xlu0 %v822, 8
        %v887 = vpop.permute.xlu0 %886
        %892 = vrot.lane.b32.xlu0 %v811, 16
        %v893 = vpop.permute.xlu0 %892
        %894 = vrot.lane.b32.xlu0 %v824, 16
        %v895 = vpop.permute.xlu0 %894
        %896 = vrot.lane.b32.xlu0 %v825, 16
        %v897 = vpop.permute.xlu0 %896
        %898 = vrot.lane.b32.xlu0 %v826, 16
        %v899 = vpop.permute.xlu0 %898
        %vm900 = vcmask 64512
        %v903 = vsel %vm900, %v872, %v881
        %v906 = vsel %vm900, %v873, %v883
        %v909 = vsel %vm900, %v874, %v885
        %v912 = vsel %vm900, %v875, %v887
        %vm913 = vcmask 130048
        %v915 = vsel %vm913, %v903, %v893
        %v917 = vsel %vm913, %v906, %v895
        %v919 = vsel %vm913, %v909, %v897
        %v921 = vsel %vm913, %v912, %v899
        %v923 = vshrl.u32 %v816, 16
        %v925 = vrot.slane %v923, 7
        %v926 = vshll.u32 %v816, 16
        %v928 = vor.u32 %v925, %v926
        %v930 = vshrl.u32 %v817, 16
        %v932 = vrot.slane %v930, 7
        %v933 = vshll.u32 %v817, 16
        %v935 = vor.u32 %v932, %v933
        %v937 = vshrl.u32 %v818, 16
        %v939 = vrot.slane %v937, 7
        %v940 = vshll.u32 %v818, 16
        %v942 = vor.u32 %v939, %v940
        %v944 = vshrl.u32 %v819, 16
        %v946 = vrot.slane %v944, 7
        %v947 = vshll.u32 %v819, 16
        %v949 = vor.u32 %v946, %v947
        %v954 = vsel %vm871, 0, %v928
        %v955 = vsel %vm871, 0, %v935
        %v956 = vsel %vm871, 0, %v942
        %v957 = vsel %vm871, 0, %v949
        %962 = vrot.lane.b32.xlu0 %v812, 8
        %v963 = vpop.permute.xlu0 %962
        %964 = vrot.lane.b32.xlu0 %v813, 8
        %v965 = vpop.permute.xlu0 %964
        %966 = vrot.lane.b32.xlu0 %v814, 8
        %v967 = vpop.permute.xlu0 %966
        %968 = vrot.lane.b32.xlu0 %v815, 8
        %v969 = vpop.permute.xlu0 %968
        %974 = vrot.lane.b32.xlu0 %v816, 16
        %v975 = vpop.permute.xlu0 %974
        %976 = vrot.lane.b32.xlu0 %v817, 16
        %v977 = vpop.permute.xlu0 %976
        %978 = vrot.lane.b32.xlu0 %v818, 16
        %v979 = vpop.permute.xlu0 %978
        %980 = vrot.lane.b32.xlu0 %v819, 16
        %v981 = vpop.permute.xlu0 %980
        %v984 = vsel %vm900, %v954, %v963
        %v987 = vsel %vm900, %v955, %v965
        %v990 = vsel %vm900, %v956, %v967
        %v993 = vsel %vm900, %v957, %v969
        %v995 = vsel %vm913, %v984, %v975
        %v997 = vsel %vm913, %v987, %v977
        %v999 = vsel %vm913, %v990, %v979
        %v1001 = vsel %vm913, %v993, %v981
        %v1006 = vunpack.c.l.b16 %v995
        %v1007 = vunpack.c.l.b16 %v997
        %v1008 = vunpack.c.l.b16 %v999
        %v1009 = vunpack.c.l.b16 %v1001
        %v1010 = vpack.c.b16 %v1007, %v1006
        %v1011 = vpack.c.b16 %v1009, %v1008
        %v1015 = vunpack.c.l.b16 %v831
        %v1016 = vunpack.c.l.b16 %v832
        %v1017 = vunpack.c.l.b16 %v833
        %v1018 = vpack.c.b16 %v1016, %v1015
        %v1019 = vpack.c.b16 %v1017, %v1017
        %vm1021 = vcmask 195584
        %v1023 = vsel %vm1021, %v1010, 0
        %v1026 = vsel %vm1021, %v1011, 0
        %vm1028 = vcmask 1043456
        %v1030 = vsel %vm1028, %v1019, 0
        %1032 = vmatprep.subr.bf16.mxu0 0
        %1033 = vmatpush1.bf16.msra.mxu0 %v1018
        %1034 = vmatprep.subr.bf16.mxu0 0
        %1035 = vmatpush1.bf16.msra.mxu0 %v1030
        %1036 = vmatprep.subr.bf16.mxu0 0
        %1037 = vmatpush1.bf16.msra.mxu0 0
        %1038 = vmatprep.subr.bf16.mxu0 0
        %1039 = vmatpush1.bf16.msra.mxu0 0
        %1040 = vmatprep.subr.bf16.mxu0 0
        %1041 = vmatpush1.bf16.msra.mxu0 0
        %1042 = vmatprep.subr.bf16.mxu0 0
        %1043 = vmatpush1.bf16.msra.mxu0 0
        %1044 = vmatprep.subr.bf16.mxu0 0
        %1045 = vmatpush1.bf16.msra.mxu0 0
        %1046 = vmatprep.subr.bf16.mxu0 0
        %1047 = vmatpush1.bf16.msra.mxu0 0
        %1048 = vmatprep.subr.bf16.mxu0 0
        %1049 = vmatpush1.bf16.msra.mxu0 0
        %1050 = vmatprep.subr.bf16.mxu0 0
        %1051 = vmatpush1.bf16.msra.mxu0 0
        %1052 = vmatprep.subr.bf16.mxu0 0
        %1053 = vmatpush1.bf16.msra.mxu0 0
        %1054 = vmatprep.subr.bf16.mxu0 0
        %1055 = vmatpush1.bf16.msra.mxu0 0
        %1056 = vmatprep.subr.bf16.mxu0 0
        %1057 = vmatpush1.bf16.msra.mxu0 0
        %1058 = vmatprep.subr.bf16.mxu0 0
        %1059 = vmatpush1.bf16.msra.mxu0 0
        %1060 = vmatprep.subr.bf16.mxu0 0
        %1061 = vmatpush1.bf16.msra.mxu0 0
        %1062 = vmatprep.subr.bf16.mxu0 0
        %1063 = vmatpush1.bf16.msra.mxu0 0
        %1064 = vmatprep.mubr.bf16.mxu0 0
        %1065 = vmatmul.mubr.bf16.gmra.mrb[0].mxu0 %v1023
        %v1066 = vpop.f32.mrb[0].mxu0
        %v1067 = vadd.f32 0.0, %v1066
        %v1068 = vpop.f32.mrb[0].mxu0
        %v1069 = vpop.f32.mrb[0].mxu0
        %v1070 = vadd.f32 0.0, %v1069
        %v1071 = vpop.f32.mrb[0].mxu0
        %1072 = vmatprep.mubr.bf16.mxu0 0
        %1073 = vmatmul.mubr.bf16.gmra.mrb[0].mxu0 %v1026
        %v1074 = vpop.f32.mrb[0].mxu0
        %v1075 = vadd.f32 0.0, %v1074
        %v1076 = vpop.f32.mrb[0].mxu0
        %v1077 = vpop.f32.mrb[0].mxu0
        %v1078 = vadd.f32 0.0, %v1077
        %v1079 = vpop.f32.mrb[0].mxu0
        %1080 = vdwg.mxu0
        %v1085 = vunpack.c.l.b16 %v915
        %v1086 = vunpack.c.l.b16 %v917
        %v1087 = vunpack.c.l.b16 %v919
        %v1088 = vunpack.c.l.b16 %v921
        %v1089 = vpack.c.b16 %v1086, %v1085
        %v1090 = vpack.c.b16 %v1088, %v1087
        %v1094 = vunpack.c.l.b16 %v828
        %v1095 = vunpack.c.l.b16 %v829
        %v1096 = vunpack.c.l.b16 %v830
        %v1097 = vpack.c.b16 %v1095, %v1094
        %v1098 = vpack.c.b16 %v1096, %v1096
        %v1101 = vsel %vm1021, %v1089, 0
        %v1104 = vsel %vm1021, %v1090, 0
        %v1107 = vsel %vm1028, %v1098, 0
        %1109 = vmatprep.subr.bf16.mxu0 0
        %1110 = vmatpush1.bf16.msra.mxu0 %v1097
        %1111 = vmatprep.subr.bf16.mxu0 0
        %1112 = vmatpush1.bf16.msra.mxu0 %v1107
        %1113 = vmatprep.subr.bf16.mxu0 0
        %1114 = vmatpush1.bf16.msra.mxu0 0
        %1115 = vmatprep.subr.bf16.mxu0 0
        %1116 = vmatpush1.bf16.msra.mxu0 0
        %1117 = vmatprep.subr.bf16.mxu0 0
        %1118 = vmatpush1.bf16.msra.mxu0 0
        %1119 = vmatprep.subr.bf16.mxu0 0
        %1120 = vmatpush1.bf16.msra.mxu0 0
        %1121 = vmatprep.subr.bf16.mxu0 0
        %1122 = vmatpush1.bf16.msra.mxu0 0
        %1123 = vmatprep.subr.bf16.mxu0 0
        %1124 = vmatpush1.bf16.msra.mxu0 0
        %1125 = vmatprep.subr.bf16.mxu0 0
        %1126 = vmatpush1.bf16.msra.mxu0 0
        %1127 = vmatprep.subr.bf16.mxu0 0
        %1128 = vmatpush1.bf16.msra.mxu0 0
        %1129 = vmatprep.subr.bf16.mxu0 0
        %1130 = vmatpush1.bf16.msra.mxu0 0
        %1131 = vmatprep.subr.bf16.mxu0 0
        %1132 = vmatpush1.bf16.msra.mxu0 0
        %1133 = vmatprep.subr.bf16.mxu0 0
        %1134 = vmatpush1.bf16.msra.mxu0 0
        %1135 = vmatprep.subr.bf16.mxu0 0
        %1136 = vmatpush1.bf16.msra.mxu0 0
        %1137 = vmatprep.subr.bf16.mxu0 0
        %1138 = vmatpush1.bf16.msra.mxu0 0
        %1139 = vmatprep.subr.bf16.mxu0 0
        %1140 = vmatpush1.bf16.msra.mxu0 0
        %1141 = vmatprep.mubr.bf16.mxu0 0
        %1142 = vmatmul.mubr.bf16.gmra.mrb[0].mxu0 %v1101
        %v1143 = vpop.f32.mrb[0].mxu0
        %v1144 = vadd.f32 %v1067, %v1143
        %v1145 = vpop.f32.mrb[0].mxu0
        %v1146 = vpop.f32.mrb[0].mxu0
        %v1147 = vadd.f32 %v1070, %v1146
        %v1148 = vpop.f32.mrb[0].mxu0
        %1149 = vmatprep.mubr.bf16.mxu0 0
        %1150 = vmatmul.mubr.bf16.gmra.mrb[0].mxu0 %v1104
        %v1151 = vpop.f32.mrb[0].mxu0
        %v1152 = vadd.f32 %v1075, %v1151
        %v1153 = vpop.f32.mrb[0].mxu0
        %v1154 = vpop.f32.mrb[0].mxu0
        %v1155 = vadd.f32 %v1078, %v1154
        %v1156 = vpop.f32.mrb[0].mxu0
        %1157 = vdwg.mxu0
        %v1159 = vshrl.u32 %v827, 16
        %v1161 = vrot.slane %v1159, 7
        %v1162 = vshll.u32 %v827, 16
        %v1164 = vor.u32 %v1161, %v1162
        %v1166 = vsel %vm871, 0, %v1164
        %1168 = vrot.lane.b32.xlu0 %v823, 8
        %v1169 = vpop.permute.xlu0 %1168
        %1171 = vrot.lane.b32.xlu0 %v827, 16
        %v1172 = vpop.permute.xlu0 %1171
        %v1175 = vsel %vm900, %v1166, %v1169
        %v1177 = vsel %vm913, %v1175, %v1172
        %v1179 = vunpack.c.l.b16 %v1177
        %v1180 = vpack.c.b16 %v1087, %v1086
        %v1181 = vpack.c.b16 %v1179, %v1088
        %v1185 = vunpack.c.l.b16 %v834
        %v1186 = vunpack.c.l.b16 %v835
        %v1187 = vunpack.c.l.b16 %v836
        %v1188 = vpack.c.b16 %v1186, %v1185
        %v1189 = vpack.c.b16 %v1187, %v1187
        %v1192 = vsel %vm1021, %v1180, 0
        %v1195 = vsel %vm1021, %v1181, 0
        %v1198 = vsel %vm1028, %v1189, 0
        %1200 = vmatprep.subr.bf16.mxu0 0
        %1201 = vmatpush1.bf16.msra.mxu0 %v1188
        %1202 = vmatprep.subr.bf16.mxu0 0
        %1203 = vmatpush1.bf16.msra.mxu0 %v1198
        %1204 = vmatprep.subr.bf16.mxu0 0
        %1205 = vmatpush1.bf16.msra.mxu0 0
        %1206 = vmatprep.subr.bf16.mxu0 0
        %1207 = vmatpush1.bf16.msra.mxu0 0
        %1208 = vmatprep.subr.bf16.mxu0 0
        %1209 = vmatpush1.bf16.msra.mxu0 0
        %1210 = vmatprep.subr.bf16.mxu0 0
        %1211 = vmatpush1.bf16.msra.mxu0 0
        %1212 = vmatprep.subr.bf16.mxu0 0
        %1213 = vmatpush1.bf16.msra.mxu0 0
        %1214 = vmatprep.subr.bf16.mxu0 0
        %1215 = vmatpush1.bf16.msra.mxu0 0
        %1216 = vmatprep.subr.bf16.mxu0 0
        %1217 = vmatpush1.bf16.msra.mxu0 0
        %1218 = vmatprep.subr.bf16.mxu0 0
        %1219 = vmatpush1.bf16.msra.mxu0 0
        %1220 = vmatprep.subr.bf16.mxu0 0
        %1221 = vmatpush1.bf16.msra.mxu0 0
        %1222 = vmatprep.subr.bf16.mxu0 0
        %1223 = vmatpush1.bf16.msra.mxu0 0
        %1224 = vmatprep.subr.bf16.mxu0 0
        %1225 = vmatpush1.bf16.msra.mxu0 0
        %1226 = vmatprep.subr.bf16.mxu0 0
        %1227 = vmatpush1.bf16.msra.mxu0 0
        %1228 = vmatprep.subr.bf16.mxu0 0
        %1229 = vmatpush1.bf16.msra.mxu0 0
        %1230 = vmatprep.subr.bf16.mxu0 0
        %1231 = vmatpush1.bf16.msra.mxu0 0
        %1232 = vmatprep.mubr.bf16.mxu0 0
        %1233 = vmatmul.mubr.bf16.gmra.mrb[0].mxu0 %v1192
        %v1234 = vpop.f32.mrb[0].mxu0
        %v1235 = vadd.f32 0.0, %v1234
        %v1236 = vpop.f32.mrb[0].mxu0
        %v1237 = vpop.f32.mrb[0].mxu0
        %v1238 = vadd.f32 0.0, %v1237
        %v1239 = vpop.f32.mrb[0].mxu0
        %1240 = vmatprep.mubr.bf16.mxu0 0
        %1241 = vmatmul.mubr.bf16.gmra.mrb[0].mxu0 %v1195
        %v1242 = vpop.f32.mrb[0].mxu0
        %v1243 = vadd.f32 0.0, %v1242
        %v1244 = vpop.f32.mrb[0].mxu0
        %v1245 = vpop.f32.mrb[0].mxu0
        %v1246 = vadd.f32 0.0, %v1245
        %v1247 = vpop.f32.mrb[0].mxu0
        %1248 = vdwg.mxu0
        %v1249 = vadd.f32 %v1144, %v1235
        %v1250 = vadd.f32 %v1147, %v1238
        %v1251 = vadd.f32 %v1152, %v1243
        %v1252 = vadd.f32 %v1155, %v1246
        %v1253 = vlaneseq
        %v1254 = vshrl.u32 %v1253, 7
        %v1255 = vsub.s32 2, %v1254
        %v1256 = vrot.slane %v356, %v1255
        %v1257 = vadd.f32 %v1249, %v1256
        %v1258 = vadd.f32 %v1250, %v1256
        %v1259 = vadd.f32 %v1251, %v1256
        %v1260 = vadd.f32 %v1252, %v1256
        %v1261 = vxor.u32 %v1257, 2147483648
        %v1262 = vxor.u32 %v1258, 2147483648
        %v1263 = vxor.u32 %v1259, 2147483648
        %v1264 = vxor.u32 %v1260, 2147483648
        %v1265 = vmul.f32 %v1261, 1.442695
        %v1266 = vpow.pop %v1265
        %v1267 = vmul.f32 %v1262, 1.442695
        %v1268 = vpow.pop %v1267
        %v1269 = vmul.f32 %v1263, 1.442695
        %v1270 = vpow.pop %v1269
        %v1271 = vmul.f32 %v1264, 1.442695
        %v1272 = vpow.pop %v1271
        %v1273 = vadd.f32 %v1266, 1.0
        %v1274 = vadd.f32 %v1268, 1.0
        %v1275 = vadd.f32 %v1270, 1.0
        %v1276 = vadd.f32 %v1272, 1.0
        %v1277 = vrcp.pop %v1273
        %v1278 = vmul.f32 1.0, %v1277
        %v1279 = vrcp.pop %v1274
        %v1280 = vmul.f32 1.0, %v1279
        %v1281 = vrcp.pop %v1275
        %v1282 = vmul.f32 1.0, %v1281
        %v1283 = vrcp.pop %v1276
        %v1284 = vmul.f32 1.0, %v1283
        %v1285 = vmul.f32 %v1257, %v1278
        %v1286 = vmul.f32 %v1258, %v1280
        %v1287 = vmul.f32 %v1259, %v1282
        %v1288 = vmul.f32 %v1260, %v1284
        %1293 = vrot.lane.b32.xlu0 %v480, 8
        %v1294 = vpop.permute.xlu0 %1293
        %1295 = vrot.lane.b32.xlu0 %v481, 8
        %v1296 = vpop.permute.xlu0 %1295
        %1297 = vrot.lane.b32.xlu0 %v482, 8
        %v1298 = vpop.permute.xlu0 %1297
        %1299 = vrot.lane.b32.xlu0 %v483, 8
        %v1300 = vpop.permute.xlu0 %1299
        %v1305 = vsel %vm900, %v1285, %v1294
        %v1306 = vsel %vm900, %v1286, %v1296
        %v1307 = vsel %vm900, %v1287, %v1298
        %v1308 = vsel %vm900, %v1288, %v1300
        %1309 = vst.msk [vmem:[%s316] sm:$0xff] %vm913, %v1305
        %1310 = vst.msk [vmem:[%s316 + $0x8] sm:$0xff] %vm913, %v1306
        %1311 = vst.msk [vmem:[%s316 + $0x10] sm:$0xff] %vm913, %v1307
        %1312 = vst.msk [vmem:[%s316 + $0x18] sm:$0xff] %vm913, %v1308
        %s1313 = sand.u32 %s190, 1
        %s1314 = scalar_lea.sflag [#allocation3], %s1313
        %s1315 = sand.u32 %s190, 1
        %s1316 = smul.addr %s1315, 32
        %s1317 = scalar_lea.vmem [#allocation2], %s1316
        // Predicated region
        $region45: #{_lambda_.1} parent=43 // pred_check
          %p1318 = pneg %p200
        $region46: #{_lambda_.1} parent=43 // pred_check_branch
          %1320 = sbr.rel (%p1318) target = $region48
        $region47: #{_lambda_.1} parent=43 // pred_region
          %s1321 = smul.u32 4, %s25
          %s1323 = ssub.s32 512, 512
          %1324 = vsyncadd %s1314, %s1323
          %s1325 = smul.addr %s24, 8
          %s1326 = sadd.s32 %s1321, %s1325
          %s1327 = smul.addr %s1326, 128
          %s1328 = scalar_lea.hbm %s6, %s1327
          %s1329 = sshll.u32 %s1317, 4
          %s1330 = int_to_ptr.vmem [resolvable:$true] %s1329
          %1335 = dma.vmem_to_hbm [thread:$0]  %s1330, 512, %s1328, %s1314, 128, 128, 8
        $region48: #{_lambda_.1} parent=43 // pred_fallthru
          _
      $region44: #{_lambda_.1} parent=5 // pred_fallthru
        _
      %p1336 = scmp.le.s32.totalorder 2, %s15
      // Predicated region
      $region49: #{_lambda_.1} parent=5 // pred_check
        %p1337 = pneg %p1336
      $region50: #{_lambda_.1} parent=5 // pred_check_branch
        %1339 = sbr.rel (%p1337) target = $region52
      $region51: #{_lambda_.1} parent=5 // pred_region
        %s1340 = ssub.s32 %s15, 2
        // Predicated region
        $region53: #{_lambda_.1} parent=51 // pred_check
          %p1341 = pneg %p206
        $region54: #{_lambda_.1} parent=51 // pred_check_branch
          %1343 = sbr.rel (%p1341) target = $region56
        $region55: #{_lambda_.1} parent=51 // pred_region
          %s1344 = sand.u32 %s191, 1
          %s1345 = scalar_lea.sflag [#allocation3], %s1344
          %s1346 = sand.u32 %s191, 1
          %s1347 = smul.addr %s1346, 32
          %s1348 = scalar_lea.vmem [#allocation2], %s1347
          %1349 = dma.done %s1345, 512
        $region56: #{_lambda_.1} parent=51 // pred_fallthru
          _
      $region52: #{_lambda_.1} parent=5 // pred_fallthru
        _
    $region6: #{_lambda_.1} parent=1 // loop_footer
      %s19 = sadd.s32 1, %s15
    $region7: #{_lambda_.1} parent=1 // loop_footer_branch
      %14 = sbr.rel target = $region3
    $region8: #{_lambda_.1} parent=1 // loop_exit
      _
    %1350 = vsyncpa [#allocation3], 1
    %s1351 = scalar_lea.sflag [#allocation3], 1
    %1352 = vsyncpa %s1351, 1

</llo_original>
